<compile_context>
chip_gen: v7x
topology: tpu7x:2x2x1
jax: 0.10.0
libtpu: 0.0.40
codegen_flags: <defaults>
</compile_context>

<pallas_src>
import jax
import jax.numpy as jnp
from jax import lax
from jax.experimental import pallas as pl
from jax.experimental.pallas import tpu as pltpu


def simclr_kernel(x_ref, we_ref, be_ref, w1_ref, b1_ref, w2_ref, b2_ref,
                  h_ref, z_ref, acc_ref):
    k = pl.program_id(1)

    @pl.when(k == 0)
    def _init():
        acc_ref[...] = jnp.zeros_like(acc_ref)

    # ---- Encoder partial product for this K tile: bf16 MXU, f32 accumulation ----
    # (x arrives in f32 and is cast to the MXU compute dtype here, in VMEM.)
    acc_ref[...] += jnp.dot(x_ref[...].astype(we_ref.dtype), we_ref[...],
                            preferred_element_type=jnp.float32)

    @pl.when(k == pl.num_programs(1) - 1)
    def _finalize():
        # ---- Encoder bias + ReLU ----
        h = jnp.maximum(acc_ref[...] + be_ref[...], 0.0)
        h_ref[...] = h.astype(h_ref.dtype)

        # ---- ProjectionHead fc1: Linear(emb -> 2*emb) + ReLU ----
        t = jnp.dot(h.astype(w1_ref.dtype), w1_ref[...],
                    preferred_element_type=jnp.float32)
        t = jnp.maximum(t + b1_ref[...], 0.0)

        # ---- ProjectionHead fc2: Linear(2*emb -> proj) ----
        p = jnp.dot(t.astype(w2_ref.dtype), w2_ref[...],
                    preferred_element_type=jnp.float32)
        p = p + b2_ref[...]

        # ---- F.normalize(p, dim=1): p / max(||p||, 1e-12) via one EUP rsqrt ----
        sumsq = jnp.sum(p * p, axis=1, keepdims=True)
        z = p * lax.rsqrt(jnp.maximum(sumsq, 1e-24))
        z_ref[...] = z.astype(z_ref.dtype)


def _round_up(n, m):
    return (n + m - 1) // m * m


def _cdiv(a, b):
    return -(-a // b)


def _pad2(a, shape):
    return jnp.pad(a, [(0, s - d) for d, s in zip(a.shape, shape)])


def _spec(shape, index_map, buffer_count=None):
    """BlockSpec; when supported, pin resident (constant-index) blocks to 1 buffer."""
    if buffer_count is not None:
        try:
            return pl.BlockSpec(shape, index_map,
                                pipeline_mode=pl.Buffered(buffer_count))
        except (TypeError, AttributeError):
            pass
    return pl.BlockSpec(shape, index_map)


def _vmem_bytes(tb, tk, nk, Ep, Hp, Pp, x_bytes, w_bytes, o_bytes):
    """Rough resident-VMEM estimate for one grid step (incl. pipeline buffers)."""
    we_bufs = 1 if nk == 1 else 2                  # encoder weight: resident vs streamed over K
    weights = (tk * Ep * we_bufs + Ep * Hp + Hp * Pp) * w_bytes
    biases = 8 * (Ep + Hp + Pp) * 4                # (1,N) f32 tiles pad to 8 sublanes
    x_io = 2 * tb * tk * x_bytes                   # double-buffered x tile (f32 in HBM)
    outs = 2 * tb * (Ep + Pp) * o_bytes            # double-buffered h/z output tiles
    acc = tb * Ep * 4                              # f32 accumulator scratch
    live = tb * (Ep + Hp + Pp) * 4                 # f32 temporaries in the finalize step
    return weights + biases + x_io + outs + acc + live


def _choose_tiling(B, K, Ep, Hp, Pp, budget, want_b_steps, x_bytes, w_bytes, o_bytes):
    """Pick (batch tile TB, K tile TK, number of K steps NK) under the VMEM budget."""
    b8 = _round_up(max(B, 1), 8)
    tb_cap = max(128, min(512, _round_up(b8, 128)))         # TB floor of 128 rows
    tb_candidates = [t for t in (512, 256, 128, 64, 32, 16, 8) if t <= tb_cap]

    def enough_steps(tb):
        return _cdiv(b8, tb) >= want_b_steps

    # 1) Keep the whole reduction (K) resident: one K step, no K padding needed.
    for tb in tb_candidates:
        if not enough_steps(tb) and tb != tb_candidates[-1]:
            continue
        if _vmem_bytes(tb, K, 1, Ep, Hp, Pp, x_bytes, w_bytes, o_bytes) <= budget:
            return tb, K, 1

    # 2) Long signal: tile the K reduction axis so TB stays large (f32 acc scratch).
    for tb in tb_candidates:
        if not enough_steps(tb) and tb != tb_candidates[-1]:
            continue
        fixed = _vmem_bytes(tb, 0, 2, Ep, Hp, Pp, x_bytes, w_bytes, o_bytes)
        per_k = 2 * (Ep * w_bytes + tb * x_bytes)   # dbl-buffered we tile + x tile, per K elem
        if budget <= fixed:
            continue
        tk = int((budget - fixed) // per_k) // 128 * 128
        tk = min(tk, _round_up(K, 128))
        if tk >= 128:
            return tb, tk, _round_up(K, tk) // tk

    # Last resort: smallest batch tile, 128-wide K tiles.
    tb = tb_candidates[-1]
    return tb, 128, _round_up(K, 128) // 128


def simclr1d_forward(x_ncl, params, compute_dtype=jnp.bfloat16,
                     out_dtype=jnp.bfloat16):
    """x_ncl: (B, C, L). Returns (h, z) like SimCLR1D.forward (dtypes = out_dtype)."""
    B, C, L = x_ncl.shape
    K = C * L
    we, be, w1, b1, w2, b2 = params
    emb, hid, proj = we.shape[1], w1.shape[1], w2.shape[1]

    # Lane-dense (multiple-of-128) feature dims -> unmasked vector stores.
    Ep = _round_up(emb, 128)
    Hp = _round_up(hid, 128)
    Pp = _round_up(proj, 128)

    # Generation-aware VMEM sizing (v5e/v6e: 128 MiB physical, v7x: 64 MiB).
    try:
        vmem_phys = int(pltpu.get_tpu_info().vmem_capacity_bytes)
    except Exception:  # query unavailable -> assume the small (v7x) size: always safe
        vmem_phys = 64 << 20
    small_vmem = vmem_phys <= (80 << 20)            # v7x-like (64 MiB, two TensorCores)
    budget = int(vmem_phys * (0.68 if small_vmem else 0.75))
    vmem_limit = min(int(vmem_phys * 0.87), vmem_phys - (4 << 20))

    x_bytes = jnp.dtype(x_ncl.dtype).itemsize       # x stays in its native dtype in HBM
    w_bytes = jnp.dtype(compute_dtype).itemsize
    o_bytes = jnp.dtype(out_dtype).itemsize

    b8 = _round_up(B, 8)
    # On two-TensorCore parts keep >= 2 steps on the "parallel" batch axis when B allows.
    want_b_steps = 2 if (small_vmem and b8 >= 256) else 1
    TB, TK, NK = _choose_tiling(B, K, Ep, Hp, Pp, budget, want_b_steps,
                                x_bytes, w_bytes, o_bytes)
    Kp = TK * NK
    Bp = _round_up(max(B, TB), TB)

    # x is fed to the kernel as-is (no wrapper cast); the pad below only copies when
    # B % TB != 0 or the K axis is actually tiled (zero rows/cols keep the math exact).
    x_flat = x_ncl.reshape(B, K)                    # row-major NCL flatten == torch .view
    if (Bp, Kp) != (B, K):
        x_flat = _pad2(x_flat, (Bp, Kp))

    # Weights/biases: zero-pad to lane-dense shapes and cast MXU operands to bf16 once.
    wep = _pad2(we, (Kp, Ep)).astype(compute_dtype)
    w1p = _pad2(w1, (Ep, Hp)).astype(compute_dtype)
    w2p = _pad2(w2, (Hp, Pp)).astype(compute_dtype)
    bep = _pad2(be.reshape(1, -1), (1, Ep)).astype(jnp.float32)
    b1p = _pad2(b1.reshape(1, -1), (1, Hp)).astype(jnp.float32)
    b2p = _pad2(b2.reshape(1, -1), (1, Pp)).astype(jnp.float32)

    grid = (Bp // TB, NK)

    out_specs = (
        pl.BlockSpec((TB, Ep), lambda i, k: (i, 0)),     # h tile (written at last k step)
        pl.BlockSpec((TB, Pp), lambda i, k: (i, 0)),     # z tile
    )
    out_shape = (
        jax.ShapeDtypeStruct((Bp, Ep), out_dtype),
        jax.ShapeDtypeStruct((Bp, Pp), out_dtype),
    )

    flops = 2 * Bp * (Kp * Ep + Ep * Hp + Hp * Pp)
    bytes_accessed = (Bp * Kp * x_bytes
                      + (Kp * Ep + Ep * Hp + Hp * Pp) * w_bytes
                      + (Ep + Hp + Pp) * 4
                      + Bp * (Ep + Pp) * o_bytes)
    cost = pl.CostEstimate(flops=flops, transcendentals=Bp,
                           bytes_accessed=bytes_accessed)

    def _call(single_buffer_weights):
        bc = 1 if single_buffer_weights else None
        in_specs = [
            pl.BlockSpec((TB, TK), lambda i, k: (i, k)),              # x tile, streamed
            _spec((TK, Ep), lambda i, k: (k, 0),
                  bc if NK == 1 else None),                           # encoder weight
            _spec((1, Ep), lambda i, k: (0, 0), bc),
            _spec((Ep, Hp), lambda i, k: (0, 0), bc),                 # proj fc1 weight
            _spec((1, Hp), lambda i, k: (0, 0), bc),
            _spec((Hp, Pp), lambda i, k: (0, 0), bc),                 # proj fc2 weight
            _spec((1, Pp), lambda i, k: (0, 0), bc),
        ]
        return pl.pallas_call(
            simclr_kernel,
            out_shape=out_shape,
            grid=grid,
            in_specs=in_specs,
            out_specs=out_specs,
            scratch_shapes=[pltpu.VMEM((TB, Ep), jnp.float32)],
            compiler_params=pltpu.CompilerParams(
                dimension_semantics=("parallel", "arbitrary"),
                vmem_limit_bytes=vmem_limit,
            ),
            cost_estimate=cost,
        )(x_flat, wep, bep, w1p, b1p, w2p, b2p)

    try:
        h_pad, z_pad = _call(True)
    except Exception:
        # Pallas versions that reject pipeline_mode=pl.Buffered(1) fall back to the
        # default double-buffered (still correct) path.
        h_pad, z_pad = _call(False)

    return h_pad[:B, :emb], z_pad[:B, :proj]


def init_params(key, in_dim, emb_dim, proj_dim):
    """Deterministic synthetic parameters (PyTorch-like uniform fan-in init)."""
    ks = jax.random.split(key, 6)

    def lin(kw, kb, fan_in, fan_out):
        bound = 1.0 / jnp.sqrt(fan_in)
        w = jax.random.uniform(kw, (fan_in, fan_out), jnp.float32, -bound, bound)
        b = jax.random.uniform(kb, (1, fan_out), jnp.float32, -bound, bound)
        return w, b

    we, be = lin(ks[0], ks[1], in_dim, emb_dim)            # encoder Linear
    w1, b1 = lin(ks[2], ks[3], emb_dim, emb_dim * 2)       # proj fc1
    w2, b2 = lin(ks[4], ks[5], emb_dim * 2, proj_dim)      # proj fc2
    return we, be, w1, b1, w2, b2


def reference_forward(x_ncl, params):
    """Plain-JAX f32 reference mirroring the PyTorch semantics."""
    we, be, w1, b1, w2, b2 = params
    B = x_ncl.shape[0]
    x = x_ncl.reshape(B, -1)
    h = jnp.maximum(x @ we + be, 0.0)
    t = jnp.maximum(h @ w1 + b1, 0.0)
    p = t @ w2 + b2
    n = jnp.sqrt(jnp.sum(p * p, axis=1, keepdims=True))
    z = p / jnp.maximum(n, 1e-12)
    return h, z


if __name__ == "__main__":
    # Small shapes consistent with a 1D SimCLR setup (NCL layout).
    B, C, L = 8, 4, 16
    emb_dim, proj_dim = 32, 32

    key = jax.random.PRNGKey(0)
    kx, kp = jax.random.split(key)
    x = jax.random.normal(kx, (B, C, L), dtype=jnp.float32)
    params = init_params(kp, C * L, emb_dim, proj_dim)

    h, z = simclr1d_forward(x, params)
    jax.block_until_ready((h, z))

    h_ref, z_ref = reference_forward(x, params)
    # Tolerances sized for bf16 MXU inputs + bf16 outputs (f32 accumulation inside).
    assert jnp.allclose(h.astype(jnp.float32), h_ref, atol=5e-2, rtol=5e-2)
    assert jnp.allclose(z.astype(jnp.float32), z_ref, atol=5e-2, rtol=5e-2)

    print("KERNEL_OK")
</pallas_src>

<mosaic_0001>
module attributes {stable_mosaic.version = 11 : i64} {
  func.func @simclr_kernel(%arg0: i32, %arg1: i32, %arg2: memref<128x64xf32, #tpu.memory_space<vmem>>, %arg3: memref<64x128xbf16, #tpu.memory_space<vmem>>, %arg4: memref<1x128xf32, #tpu.memory_space<vmem>>, %arg5: memref<128x128xbf16, #tpu.memory_space<vmem>>, %arg6: memref<1x128xf32, #tpu.memory_space<vmem>>, %arg7: memref<128x128xbf16, #tpu.memory_space<vmem>>, %arg8: memref<1x128xf32, #tpu.memory_space<vmem>>, %arg9: memref<128x128xbf16, #tpu.memory_space<vmem>>, %arg10: memref<128x128xbf16, #tpu.memory_space<vmem>>, %arg11: memref<128x128xf32, #tpu.memory_space<vmem>>) attributes {dimension_semantics = [#tpu.dimension_semantics<parallel>, #tpu.dimension_semantics<arbitrary>], iteration_bounds = array<i64: 1, 1>, scalar_prefetch = 0 : i64, scratch_operands = 1 : i64, tpu.core_type = #tpu.core_type<tc>, window_params = [{transform_indices = @transform_0, window_bounds = array<i64: 128, 64>}, {pipeline_mode = #tpu.pipeline_mode<synchronous>, transform_indices = @transform_1, window_bounds = array<i64: 64, 128>}, {pipeline_mode = #tpu.pipeline_mode<synchronous>, transform_indices = @transform_2, window_bounds = array<i64: 1, 128>}, {pipeline_mode = #tpu.pipeline_mode<synchronous>, transform_indices = @transform_3, window_bounds = array<i64: 128, 128>}, {pipeline_mode = #tpu.pipeline_mode<synchronous>, transform_indices = @transform_4, window_bounds = array<i64: 1, 128>}, {pipeline_mode = #tpu.pipeline_mode<synchronous>, transform_indices = @transform_5, window_bounds = array<i64: 128, 128>}, {pipeline_mode = #tpu.pipeline_mode<synchronous>, transform_indices = @transform_6, window_bounds = array<i64: 1, 128>}, {transform_indices = @transform_7, window_bounds = array<i64: 128, 128>}, {transform_indices = @transform_8, window_bounds = array<i64: 128, 128>}]} {
    %c0_i32 = arith.constant 0 : i32
    %0 = arith.cmpi eq, %arg1, %c0_i32 : i32
    %1 = arith.extui %0 : i1 to i32
    %c0_i32_0 = arith.constant 0 : i32
    %2 = arith.cmpi ne, %1, %c0_i32_0 : i32
    scf.if %2 {
      %cst_10 = arith.constant 0.000000e+00 : f32
      %13 = vector.broadcast %cst_10 : f32 to vector<128x128xf32>
      %c0_11 = arith.constant 0 : index
      %c0_12 = arith.constant 0 : index
      %14 = vector.load %arg11[%c0_11, %c0_12] : memref<128x128xf32, #tpu.memory_space<vmem>>, vector<128x128xf32>
      tpu.vector_store %arg11[%c0_11, %c0_12], %13 {strides = array<i32>} : memref<128x128xf32, #tpu.memory_space<vmem>>, vector<128x128xf32>,
    } else {
    }
    %c0 = arith.constant 0 : index
    %c0_1 = arith.constant 0 : index
    %3 = vector.load %arg11[%c0, %c0_1] : memref<128x128xf32, #tpu.memory_space<vmem>>, vector<128x128xf32>
    %c0_2 = arith.constant 0 : index
    %c0_3 = arith.constant 0 : index
    %4 = vector.load %arg2[%c0_2, %c0_3] : memref<128x64xf32, #tpu.memory_space<vmem>>, vector<128x64xf32>
    %5 = arith.truncf %4 : vector<128x64xf32> to vector<128x64xbf16>
    %c0_4 = arith.constant 0 : index
    %c0_5 = arith.constant 0 : index
    %6 = vector.load %arg3[%c0_4, %c0_5] : memref<64x128xbf16, #tpu.memory_space<vmem>>, vector<64x128xbf16>
    %cst = arith.constant dense<0.000000e+00> : vector<128x128xf32>
    %7 = tpu.matmul %5, %6, %cst {dimension_numbers = #tpu.dot_dimension_numbers<[1], [0], [0], [1], [0, 0, 1, 1], [], []>} : vector<128x64xbf16>, vector<64x128xbf16>, vector<128x128xf32> -> vector<128x128xf32>
    %8 = arith.addf %3, %7 : vector<128x128xf32>
    %c0_6 = arith.constant 0 : index
    %c0_7 = arith.constant 0 : index
    %9 = vector.load %arg11[%c0_6, %c0_7] : memref<128x128xf32, #tpu.memory_space<vmem>>, vector<128x128xf32>
    tpu.vector_store %arg11[%c0_6, %c0_7], %8 {strides = array<i32>} : memref<128x128xf32, #tpu.memory_space<vmem>>, vector<128x128xf32>,
    %c0_i32_8 = arith.constant 0 : i32
    %10 = arith.cmpi eq, %arg1, %c0_i32_8 : i32
    %11 = arith.extui %10 : i1 to i32
    %c0_i32_9 = arith.constant 0 : i32
    %12 = arith.cmpi ne, %11, %c0_i32_9 : i32
    scf.if %12 {
      %c0_10 = arith.constant 0 : index
      %c0_11 = arith.constant 0 : index
      %13 = vector.load %arg11[%c0_10, %c0_11] : memref<128x128xf32, #tpu.memory_space<vmem>>, vector<128x128xf32>
      %c0_12 = arith.constant 0 : index
      %c0_13 = arith.constant 0 : index
      %14 = vector.load %arg4[%c0_12, %c0_13] : memref<1x128xf32, #tpu.memory_space<vmem>>, vector<1x128xf32>
      %15 = vector.broadcast %14 : vector<1x128xf32> to vector<128x128xf32>
      %16 = arith.addf %13, %15 : vector<128x128xf32>
      %cst_14 = arith.constant 0.000000e+00 : f32
      %17 = vector.broadcast %cst_14 : f32 to vector<128x128xf32>
      %18 = arith.maximumf %16, %17 : vector<128x128xf32>
      %19 = arith.truncf %18 : vector<128x128xf32> to vector<128x128xbf16>
      %c0_15 = arith.constant 0 : index
      %c0_16 = arith.constant 0 : index
      %20 = vector.load %arg9[%c0_15, %c0_16] : memref<128x128xbf16, #tpu.memory_space<vmem>>, vector<128x128xbf16>
      tpu.vector_store %arg9[%c0_15, %c0_16], %19 {strides = array<i32>} : memref<128x128xbf16, #tpu.memory_space<vmem>>, vector<128x128xbf16>,
      %21 = arith.truncf %18 : vector<128x128xf32> to vector<128x128xbf16>
      %c0_17 = arith.constant 0 : index
      %c0_18 = arith.constant 0 : index
      %22 = vector.load %arg5[%c0_17, %c0_18] : memref<128x128xbf16, #tpu.memory_space<vmem>>, vector<128x128xbf16>
      %cst_19 = arith.constant dense<0.000000e+00> : vector<128x128xf32>
      %23 = tpu.matmul %21, %22, %cst_19 {dimension_numbers = #tpu.dot_dimension_numbers<[1], [0], [0], [1], [0, 0, 1, 1], [], []>} : vector<128x128xbf16>, vector<128x128xbf16>, vector<128x128xf32> -> vector<128x128xf32>
      %c0_20 = arith.constant 0 : index
      %c0_21 = arith.constant 0 : index
      %24 = vector.load %arg6[%c0_20, %c0_21] : memref<1x128xf32, #tpu.memory_space<vmem>>, vector<1x128xf32>
      %25 = vector.broadcast %24 : vector<1x128xf32> to vector<128x128xf32>
      %26 = arith.addf %23, %25 : vector<128x128xf32>
      %cst_22 = arith.constant 0.000000e+00 : f32
      %27 = vector.broadcast %cst_22 : f32 to vector<128x128xf32>
      %28 = arith.maximumf %26, %27 : vector<128x128xf32>
      %29 = arith.truncf %28 : vector<128x128xf32> to vector<128x128xbf16>
      %c0_23 = arith.constant 0 : index
      %c0_24 = arith.constant 0 : index
      %30 = vector.load %arg7[%c0_23, %c0_24] : memref<128x128xbf16, #tpu.memory_space<vmem>>, vector<128x128xbf16>
      %cst_25 = arith.constant dense<0.000000e+00> : vector<128x128xf32>
      %31 = tpu.matmul %29, %30, %cst_25 {dimension_numbers = #tpu.dot_dimension_numbers<[1], [0], [0], [1], [0, 0, 1, 1], [], []>} : vector<128x128xbf16>, vector<128x128xbf16>, vector<128x128xf32> -> vector<128x128xf32>
      %c0_26 = arith.constant 0 : index
      %c0_27 = arith.constant 0 : index
      %32 = vector.load %arg8[%c0_26, %c0_27] : memref<1x128xf32, #tpu.memory_space<vmem>>, vector<1x128xf32>
      %33 = vector.broadcast %32 : vector<1x128xf32> to vector<128x128xf32>
      %34 = arith.addf %31, %33 : vector<128x128xf32>
      %35 = arith.mulf %34, %34 : vector<128x128xf32>
      %cst_28 = arith.constant dense<0.000000e+00> : vector<128xf32>
      %36 = vector.multi_reduction <add>, %35, %cst_28 [1] : vector<128x128xf32> to vector<128xf32>
      %37 = vector.shape_cast %36 : vector<128xf32> to vector<128x1xf32>
      %cst_29 = arith.constant 1.000000e-24 : f32
      %38 = vector.broadcast %cst_29 : f32 to vector<128x1xf32>
      %39 = arith.maximumf %37, %38 : vector<128x1xf32>
      %40 = math.rsqrt %39 : vector<128x1xf32>
      %41 = vector.broadcast %40 : vector<128x1xf32> to vector<128x128xf32>
      %42 = arith.mulf %34, %41 : vector<128x128xf32>
      %43 = arith.truncf %42 : vector<128x128xf32> to vector<128x128xbf16>
      %c0_30 = arith.constant 0 : index
      %c0_31 = arith.constant 0 : index
      %44 = vector.load %arg10[%c0_30, %c0_31] : memref<128x128xbf16, #tpu.memory_space<vmem>>, vector<128x128xbf16>
      tpu.vector_store %arg10[%c0_30, %c0_31], %43 {strides = array<i32>} : memref<128x128xbf16, #tpu.memory_space<vmem>>, vector<128x128xbf16>,
    } else {
    }
    return
  }
  func.func @transform_0(%arg0: i32, %arg1: i32) -> (i32, i32) {
    %c0_i32 = arith.constant 0 : i32
    return %arg0, %arg1 : i32, i32
  }
  func.func @transform_1(%arg0: i32, %arg1: i32) -> (i32, i32) {
    %c0_i32 = arith.constant 0 : i32
    %c0_i32_0 = arith.constant 0 : i32
    return %arg1, %c0_i32 : i32, i32
  }
  func.func @transform_2(%arg0: i32, %arg1: i32) -> (i32, i32) {
    %c0_i32 = arith.constant 0 : i32
    %c0_i32_0 = arith.constant 0 : i32
    %c0_i32_1 = arith.constant 0 : i32
    return %c0_i32, %c0_i32_0 : i32, i32
  }
  func.func @transform_3(%arg0: i32, %arg1: i32) -> (i32, i32) {
    %c0_i32 = arith.constant 0 : i32
    %c0_i32_0 = arith.constant 0 : i32
    %c0_i32_1 = arith.constant 0 : i32
    return %c0_i32, %c0_i32_0 : i32, i32
  }
  func.func @transform_4(%arg0: i32, %arg1: i32) -> (i32, i32) {
    %c0_i32 = arith.constant 0 : i32
    %c0_i32_0 = arith.constant 0 : i32
    %c0_i32_1 = arith.constant 0 : i32
    return %c0_i32, %c0_i32_0 : i32, i32
  }
  func.func @transform_5(%arg0: i32, %arg1: i32) -> (i32, i32) {
    %c0_i32 = arith.constant 0 : i32
    %c0_i32_0 = arith.constant 0 : i32
    %c0_i32_1 = arith.constant 0 : i32
    return %c0_i32, %c0_i32_0 : i32, i32
  }
  func.func @transform_6(%arg0: i32, %arg1: i32) -> (i32, i32) {
    %c0_i32 = arith.constant 0 : i32
    %c0_i32_0 = arith.constant 0 : i32
    %c0_i32_1 = arith.constant 0 : i32
    return %c0_i32, %c0_i32_0 : i32, i32
  }
  func.func @transform_7(%arg0: i32, %arg1: i32) -> (i32, i32) {
    %c0_i32 = arith.constant 0 : i32
    %c0_i32_0 = arith.constant 0 : i32
    return %arg0, %c0_i32 : i32, i32
  }
  func.func @transform_8(%arg0: i32, %arg1: i32) -> (i32, i32) {
    %c0_i32 = arith.constant 0 : i32
    %c0_i32_0 = arith.constant 0 : i32
    return %arg0, %c0_i32 : i32, i32
  }
}

module attributes {stable_mosaic.version = 11 : i64} {
  func.func @simclr_kernel(%arg0: i32, %arg1: i32, %arg2: memref<128x64xf32, #tpu.memory_space<vmem>>, %arg3: memref<64x128xbf16, #tpu.memory_space<vmem>>, %arg4: memref<1x128xf32, #tpu.memory_space<vmem>>, %arg5: memref<128x128xbf16, #tpu.memory_space<vmem>>, %arg6: memref<1x128xf32, #tpu.memory_space<vmem>>, %arg7: memref<128x128xbf16, #tpu.memory_space<vmem>>, %arg8: memref<1x128xf32, #tpu.memory_space<vmem>>, %arg9: memref<128x128xbf16, #tpu.memory_space<vmem>>, %arg10: memref<128x128xbf16, #tpu.memory_space<vmem>>, %arg11: memref<128x128xf32, #tpu.memory_space<vmem>>) attributes {dimension_semantics = [#tpu.dimension_semantics<parallel>, #tpu.dimension_semantics<arbitrary>], iteration_bounds = array<i64: 1, 1>, scalar_prefetch = 0 : i64, scratch_operands = 1 : i64, tpu.core_type = #tpu.core_type<tc>, window_params = [{transform_indices = @transform_0, window_bounds = array<i64: 128, 64>}, {transform_indices = @transform_1, window_bounds = array<i64: 64, 128>}, {pipeline_mode = #tpu.pipeline_mode<synchronous>, transform_indices = @transform_2, window_bounds = array<i64: 1, 128>}, {pipeline_mode = #tpu.pipeline_mode<synchronous>, transform_indices = @transform_3, window_bounds = array<i64: 128, 128>}, {pipeline_mode = #tpu.pipeline_mode<synchronous>, transform_indices = @transform_4, window_bounds = array<i64: 1, 128>}, {pipeline_mode = #tpu.pipeline_mode<synchronous>, transform_indices = @transform_5, window_bounds = array<i64: 128, 128>}, {pipeline_mode = #tpu.pipeline_mode<synchronous>, transform_indices = @transform_6, window_bounds = array<i64: 1, 128>}, {transform_indices = @transform_7, window_bounds = array<i64: 128, 128>}, {transform_indices = @transform_8, window_bounds = array<i64: 128, 128>}]} {
    %c0_i32 = arith.constant 0 : i32
    %0 = arith.cmpi eq, %arg1, %c0_i32 : i32
    %1 = arith.extui %0 : i1 to i32
    %c0_i32_0 = arith.constant 0 : i32
    %2 = arith.cmpi ne, %1, %c0_i32_0 : i32
    scf.if %2 {
      %cst_10 = arith.constant 0.000000e+00 : f32
      %13 = vector.broadcast %cst_10 : f32 to vector<128x128xf32>
      %c0_11 = arith.constant 0 : index
      %c0_12 = arith.constant 0 : index
      %14 = vector.load %arg11[%c0_11, %c0_12] : memref<128x128xf32, #tpu.memory_space<vmem>>, vector<128x128xf32>
      tpu.vector_store %arg11[%c0_11, %c0_12], %13 {strides = array<i32>} : memref<128x128xf32, #tpu.memory_space<vmem>>, vector<128x128xf32>,
    } else {
    }
    %c0 = arith.constant 0 : index
    %c0_1 = arith.constant 0 : index
    %3 = vector.load %arg11[%c0, %c0_1] : memref<128x128xf32, #tpu.memory_space<vmem>>, vector<128x128xf32>
    %c0_2 = arith.constant 0 : index
    %c0_3 = arith.constant 0 : index
    %4 = vector.load %arg2[%c0_2, %c0_3] : memref<128x64xf32, #tpu.memory_space<vmem>>, vector<128x64xf32>
    %5 = arith.truncf %4 : vector<128x64xf32> to vector<128x64xbf16>
    %c0_4 = arith.constant 0 : index
    %c0_5 = arith.constant 0 : index
    %6 = vector.load %arg3[%c0_4, %c0_5] : memref<64x128xbf16, #tpu.memory_space<vmem>>, vector<64x128xbf16>
    %cst = arith.constant dense<0.000000e+00> : vector<128x128xf32>
    %7 = tpu.matmul %5, %6, %cst {dimension_numbers = #tpu.dot_dimension_numbers<[1], [0], [0], [1], [0, 0, 1, 1], [], []>} : vector<128x64xbf16>, vector<64x128xbf16>, vector<128x128xf32> -> vector<128x128xf32>
    %8 = arith.addf %3, %7 : vector<128x128xf32>
    %c0_6 = arith.constant 0 : index
    %c0_7 = arith.constant 0 : index
    %9 = vector.load %arg11[%c0_6, %c0_7] : memref<128x128xf32, #tpu.memory_space<vmem>>, vector<128x128xf32>
    tpu.vector_store %arg11[%c0_6, %c0_7], %8 {strides = array<i32>} : memref<128x128xf32, #tpu.memory_space<vmem>>, vector<128x128xf32>,
    %c0_i32_8 = arith.constant 0 : i32
    %10 = arith.cmpi eq, %arg1, %c0_i32_8 : i32
    %11 = arith.extui %10 : i1 to i32
    %c0_i32_9 = arith.constant 0 : i32
    %12 = arith.cmpi ne, %11, %c0_i32_9 : i32
    scf.if %12 {
      %c0_10 = arith.constant 0 : index
      %c0_11 = arith.constant 0 : index
      %13 = vector.load %arg11[%c0_10, %c0_11] : memref<128x128xf32, #tpu.memory_space<vmem>>, vector<128x128xf32>
      %c0_12 = arith.constant 0 : index
      %c0_13 = arith.constant 0 : index
      %14 = vector.load %arg4[%c0_12, %c0_13] : memref<1x128xf32, #tpu.memory_space<vmem>>, vector<1x128xf32>
      %15 = vector.broadcast %14 : vector<1x128xf32> to vector<128x128xf32>
      %16 = arith.addf %13, %15 : vector<128x128xf32>
      %cst_14 = arith.constant 0.000000e+00 : f32
      %17 = vector.broadcast %cst_14 : f32 to vector<128x128xf32>
      %18 = arith.maximumf %16, %17 : vector<128x128xf32>
      %19 = arith.truncf %18 : vector<128x128xf32> to vector<128x128xbf16>
      %c0_15 = arith.constant 0 : index
      %c0_16 = arith.constant 0 : index
      %20 = vector.load %arg9[%c0_15, %c0_16] : memref<128x128xbf16, #tpu.memory_space<vmem>>, vector<128x128xbf16>
      tpu.vector_store %arg9[%c0_15, %c0_16], %19 {strides = array<i32>} : memref<128x128xbf16, #tpu.memory_space<vmem>>, vector<128x128xbf16>,
      %21 = arith.truncf %18 : vector<128x128xf32> to vector<128x128xbf16>
      %c0_17 = arith.constant 0 : index
      %c0_18 = arith.constant 0 : index
      %22 = vector.load %arg5[%c0_17, %c0_18] : memref<128x128xbf16, #tpu.memory_space<vmem>>, vector<128x128xbf16>
      %cst_19 = arith.constant dense<0.000000e+00> : vector<128x128xf32>
      %23 = tpu.matmul %21, %22, %cst_19 {dimension_numbers = #tpu.dot_dimension_numbers<[1], [0], [0], [1], [0, 0, 1, 1], [], []>} : vector<128x128xbf16>, vector<128x128xbf16>, vector<128x128xf32> -> vector<128x128xf32>
      %c0_20 = arith.constant 0 : index
      %c0_21 = arith.constant 0 : index
      %24 = vector.load %arg6[%c0_20, %c0_21] : memref<1x128xf32, #tpu.memory_space<vmem>>, vector<1x128xf32>
      %25 = vector.broadcast %24 : vector<1x128xf32> to vector<128x128xf32>
      %26 = arith.addf %23, %25 : vector<128x128xf32>
      %cst_22 = arith.constant 0.000000e+00 : f32
      %27 = vector.broadcast %cst_22 : f32 to vector<128x128xf32>
      %28 = arith.maximumf %26, %27 : vector<128x128xf32>
      %29 = arith.truncf %28 : vector<128x128xf32> to vector<128x128xbf16>
      %c0_23 = arith.constant 0 : index
      %c0_24 = arith.constant 0 : index
      %30 = vector.load %arg7[%c0_23, %c0_24] : memref<128x128xbf16, #tpu.memory_space<vmem>>, vector<128x128xbf16>
      %cst_25 = arith.constant dense<0.000000e+00> : vector<128x128xf32>
      %31 = tpu.matmul %29, %30, %cst_25 {dimension_numbers = #tpu.dot_dimension_numbers<[1], [0], [0], [1], [0, 0, 1, 1], [], []>} : vector<128x128xbf16>, vector<128x128xbf16>, vector<128x128xf32> -> vector<128x128xf32>
      %c0_26 = arith.constant 0 : index
      %c0_27 = arith.constant 0 : index
      %32 = vector.load %arg8[%c0_26, %c0_27] : memref<1x128xf32, #tpu.memory_space<vmem>>, vector<1x128xf32>
      %33 = vector.broadcast %32 : vector<1x128xf32> to vector<128x128xf32>
      %34 = arith.addf %31, %33 : vector<128x128xf32>
      %35 = arith.mulf %34, %34 : vector<128x128xf32>
      %cst_28 = arith.constant dense<0.000000e+00> : vector<128xf32>
      %36 = vector.multi_reduction <add>, %35, %cst_28 [1] : vector<128x128xf32> to vector<128xf32>
      %37 = vector.shape_cast %36 : vector<128xf32> to vector<128x1xf32>
      %cst_29 = arith.constant 1.000000e-24 : f32
      %38 = vector.broadcast %cst_29 : f32 to vector<128x1xf32>
      %39 = arith.maximumf %37, %38 : vector<128x1xf32>
      %40 = math.rsqrt %39 : vector<128x1xf32>
      %41 = vector.broadcast %40 : vector<128x1xf32> to vector<128x128xf32>
      %42 = arith.mulf %34, %41 : vector<128x128xf32>
      %43 = arith.truncf %42 : vector<128x128xf32> to vector<128x128xbf16>
      %c0_30 = arith.constant 0 : index
      %c0_31 = arith.constant 0 : index
      %44 = vector.load %arg10[%c0_30, %c0_31] : memref<128x128xbf16, #tpu.memory_space<vmem>>, vector<128x128xbf16>
      tpu.vector_store %arg10[%c0_30, %c0_31], %43 {strides = array<i32>} : memref<128x128xbf16, #tpu.memory_space<vmem>>, vector<128x128xbf16>,
    } else {
    }
    return
  }
  func.func @transform_0(%arg0: i32, %arg1: i32) -> (i32, i32) {
    %c0_i32 = arith.constant 0 : i32
    return %arg0, %arg1 : i32, i32
  }
  func.func @transform_1(%arg0: i32, %arg1: i32) -> (i32, i32) {
    %c0_i32 = arith.constant 0 : i32
    %c0_i32_0 = arith.constant 0 : i32
    return %arg1, %c0_i32 : i32, i32
  }
  func.func @transform_2(%arg0: i32, %arg1: i32) -> (i32, i32) {
    %c0_i32 = arith.constant 0 : i32
    %c0_i32_0 = arith.constant 0 : i32
    %c0_i32_1 = arith.constant 0 : i32
    return %c0_i32, %c0_i32_0 : i32, i32
  }
  func.func @transform_3(%arg0: i32, %arg1: i32) -> (i32, i32) {
    %c0_i32 = arith.constant 0 : i32
    %c0_i32_0 = arith.constant 0 : i32
    %c0_i32_1 = arith.constant 0 : i32
    return %c0_i32, %c0_i32_0 : i32, i32
  }
  func.func @transform_4(%arg0: i32, %arg1: i32) -> (i32, i32) {
    %c0_i32 = arith.constant 0 : i32
    %c0_i32_0 = arith.constant 0 : i32
    %c0_i32_1 = arith.constant 0 : i32
    return %c0_i32, %c0_i32_0 : i32, i32
  }
  func.func @transform_5(%arg0: i32, %arg1: i32) -> (i32, i32) {
    %c0_i32 = arith.constant 0 : i32
    %c0_i32_0 = arith.constant 0 : i32
    %c0_i32_1 = arith.constant 0 : i32
    return %c0_i32, %c0_i32_0 : i32, i32
  }
  func.func @transform_6(%arg0: i32, %arg1: i32) -> (i32, i32) {
    %c0_i32 = arith.constant 0 : i32
    %c0_i32_0 = arith.constant 0 : i32
    %c0_i32_1 = arith.constant 0 : i32
    return %c0_i32, %c0_i32_0 : i32, i32
  }
  func.func @transform_7(%arg0: i32, %arg1: i32) -> (i32, i32) {
    %c0_i32 = arith.constant 0 : i32
    %c0_i32_0 = arith.constant 0 : i32
    return %arg0, %c0_i32 : i32, i32
  }
  func.func @transform_8(%arg0: i32, %arg1: i32) -> (i32, i32) {
    %c0_i32 = arith.constant 0 : i32
    %c0_i32_0 = arith.constant 0 : i32
    return %arg0, %c0_i32 : i32, i32
  }
}

</mosaic_0001>

<llo_original>
// kernel: tpu_custom_call.1
$region0: #{tpu_custom_call.1}
  #allocation0 [shape = 'u32[]', space=smem, size = 0x4, offset = 0x4, fixed_abs, tag = 'smem constant byte address 0x4 - core index']
  #allocation1 [shape = 'u32[144,128]{1,0:T(1,128)}', space=vmem, size = 0x12000, scoped, tag = 'internal scratch']
  #allocation2 [shape = 'f32[128,128]{1,0:T(8,128)}', space=vmem, size = 0x10000, scoped, tag = 'scratch operand']
  %s0 = inlined_call_operand.vmem [shape: f32[128,64], index: 0, kind: input, shape index: {}]
  %s1 = inlined_call_operand.vmem [shape: bf16[64,128], index: 1, kind: input, shape index: {}]
  %s2 = inlined_call_operand.vmem [shape: f32[1,128], index: 2, kind: input, shape index: {}]
  %s3 = inlined_call_operand.vmem [shape: bf16[128,128], index: 3, kind: input, shape index: {}]
  %s4 = inlined_call_operand.vmem [shape: f32[1,128], index: 4, kind: input, shape index: {}]
  %s5 = inlined_call_operand.vmem [shape: bf16[128,128], index: 5, kind: input, shape index: {}]
  %s6 = inlined_call_operand.vmem [shape: f32[1,128], index: 6, kind: input, shape index: {}]
  %s7 = inlined_call_operand.hbm [shape: bf16[128,128], index: 7, kind: output, shape index: {0}]
  %s8 = inlined_call_operand.hbm [shape: bf16[128,128], index: 8, kind: output, shape index: {1}]
  %9 = xla_tuple %s7, %s8
  %s10 = sld [smem:[#allocation0]]
  $region54: #{tpu_custom_call.1} parent=0
    _
  %s12 = ssub.s32 1, %s10
  %s13 = scalar_select 0, %s12, %s10
  $region1: #{tpu_custom_call.1} parent=0
    #allocation3 [shape = 'u8[32768]{0}', space=vmem, size = 0x8000, scoped, tag = 'output window, operand 0, single buffered']
    #allocation4 [shape = 's32[1]{0}', space=sflag, size = 0x4, scoped, tag = 'scoped memory for tpu_custom_call.1']
    #allocation5 [shape = 'u8[32768]{0}', space=vmem, size = 0x8000, scoped, tag = 'output window, operand 1, single buffered']
    #allocation6 [shape = 's32[1]{0}', space=sflag, size = 0x4, scoped, tag = 'scoped memory for tpu_custom_call.1']
    %14 = vsyncpa [#allocation4], 0
    %15 = vsyncpa [#allocation6], 0
    // Predicated region
    $region2: #{tpu_custom_call.1} parent=1 // pred_check
      _
    $region3: #{tpu_custom_call.1} parent=1 // pred_check_branch
      %17 = sbr.rel (0) target = $region5
    $region4: #{tpu_custom_call.1} parent=1 // pred_region
      _
    $region5: #{tpu_custom_call.1} parent=1 // pred_fallthru
      _
    // Predicated region
    $region6: #{tpu_custom_call.1} parent=1 // pred_check
      _
    $region7: #{tpu_custom_call.1} parent=1 // pred_check_branch
      %19 = sbr.rel (0) target = $region9
    $region8: #{tpu_custom_call.1} parent=1 // pred_region
      _
    $region9: #{tpu_custom_call.1} parent=1 // pred_fallthru
      _
    // Predicated region
    $region10: #{tpu_custom_call.1} parent=1 // pred_check
      _
    $region11: #{tpu_custom_call.1} parent=1 // pred_check_branch
      %21 = sbr.rel (0) target = $region13
    $region12: #{tpu_custom_call.1} parent=1 // pred_region
      _
    $region13: #{tpu_custom_call.1} parent=1 // pred_fallthru
      _
    // Predicated region
    $region14: #{tpu_custom_call.1} parent=1 // pred_check
      _
    $region15: #{tpu_custom_call.1} parent=1 // pred_check_branch
      %23 = sbr.rel (0) target = $region17
    $region16: #{tpu_custom_call.1} parent=1 // pred_region
      _
    $region17: #{tpu_custom_call.1} parent=1 // pred_fallthru
      _
    // Predicated region
    $region18: #{tpu_custom_call.1} parent=1 // pred_check
      _
    $region19: #{tpu_custom_call.1} parent=1 // pred_check_branch
      %25 = sbr.rel (0) target = $region21
    $region20: #{tpu_custom_call.1} parent=1 // pred_region
      _
    $region21: #{tpu_custom_call.1} parent=1 // pred_fallthru
      _
    // Predicated region
    $region22: #{tpu_custom_call.1} parent=1 // pred_check
      _
    $region23: #{tpu_custom_call.1} parent=1 // pred_check_branch
      %27 = sbr.rel (0) target = $region25
    $region24: #{tpu_custom_call.1} parent=1 // pred_region
      _
    $region25: #{tpu_custom_call.1} parent=1 // pred_fallthru
      _
    // Predicated region
    $region26: #{tpu_custom_call.1} parent=1 // pred_check
      _
    $region27: #{tpu_custom_call.1} parent=1 // pred_check_branch
      %29 = sbr.rel (0) target = $region29
    $region28: #{tpu_custom_call.1} parent=1 // pred_region
      _
    $region29: #{tpu_custom_call.1} parent=1 // pred_fallthru
      _
    %p31 = scmp.eq.s32.totalorder 0, 0
    // Predicated region
    $region30: #{tpu_custom_call.1} parent=1 // pred_check
      %p32 = pneg %p31
    $region31: #{tpu_custom_call.1} parent=1 // pred_check_branch
      %34 = sbr.rel (%p32) target = $region33
    $region32: #{tpu_custom_call.1} parent=1 // pred_region
      %35 = vst [vmem:[#allocation2] sm:$0xff] 0.0
      %36 = vst [vmem:[#allocation2 + $0x8] sm:$0xff] 0.0
      %37 = vst [vmem:[#allocation2 + $0x10] sm:$0xff] 0.0
      %38 = vst [vmem:[#allocation2 + $0x18] sm:$0xff] 0.0
      %39 = vst [vmem:[#allocation2 + $0x20] sm:$0xff] 0.0
      %40 = vst [vmem:[#allocation2 + $0x28] sm:$0xff] 0.0
      %41 = vst [vmem:[#allocation2 + $0x30] sm:$0xff] 0.0
      %42 = vst [vmem:[#allocation2 + $0x38] sm:$0xff] 0.0
      %43 = vst [vmem:[#allocation2 + $0x40] sm:$0xff] 0.0
      %44 = vst [vmem:[#allocation2 + $0x48] sm:$0xff] 0.0
      %45 = vst [vmem:[#allocation2 + $0x50] sm:$0xff] 0.0
      %46 = vst [vmem:[#allocation2 + $0x58] sm:$0xff] 0.0
      %47 = vst [vmem:[#allocation2 + $0x60] sm:$0xff] 0.0
      %48 = vst [vmem:[#allocation2 + $0x68] sm:$0xff] 0.0
      %49 = vst [vmem:[#allocation2 + $0x70] sm:$0xff] 0.0
      %50 = vst [vmem:[#allocation2 + $0x78] sm:$0xff] 0.0
    $region33: #{tpu_custom_call.1} parent=1 // pred_fallthru
      _
    %v51 = vld [vmem:[#allocation2] sm:$0xff]
    %v52 = vld [vmem:[#allocation2 + $0x8] sm:$0xff]
    %v53 = vld [vmem:[#allocation2 + $0x10] sm:$0xff]
    %v54 = vld [vmem:[#allocation2 + $0x18] sm:$0xff]
    %v55 = vld [vmem:[#allocation2 + $0x20] sm:$0xff]
    %v56 = vld [vmem:[#allocation2 + $0x28] sm:$0xff]
    %v57 = vld [vmem:[#allocation2 + $0x30] sm:$0xff]
    %v58 = vld [vmem:[#allocation2 + $0x38] sm:$0xff]
    %v59 = vld [vmem:[#allocation2 + $0x40] sm:$0xff]
    %v60 = vld [vmem:[#allocation2 + $0x48] sm:$0xff]
    %v61 = vld [vmem:[#allocation2 + $0x50] sm:$0xff]
    %v62 = vld [vmem:[#allocation2 + $0x58] sm:$0xff]
    %v63 = vld [vmem:[#allocation2 + $0x60] sm:$0xff]
    %v64 = vld [vmem:[#allocation2 + $0x68] sm:$0xff]
    %v65 = vld [vmem:[#allocation2 + $0x70] sm:$0xff]
    %v66 = vld [vmem:[#allocation2 + $0x78] sm:$0xff]
    %v67 = vld [vmem:[%s0] sm:$0xff]
    %v68 = vld [vmem:[%s0 + $0x8] sm:$0xff]
    %v69 = vld [vmem:[%s0 + $0x10] sm:$0xff]
    %v70 = vld [vmem:[%s0 + $0x18] sm:$0xff]
    %v71 = vld [vmem:[%s0 + $0x20] sm:$0xff]
    %v72 = vld [vmem:[%s0 + $0x28] sm:$0xff]
    %v73 = vld [vmem:[%s0 + $0x30] sm:$0xff]
    %v74 = vld [vmem:[%s0 + $0x38] sm:$0xff]
    %v75 = vld [vmem:[%s0 + $0x40] sm:$0xff]
    %v76 = vld [vmem:[%s0 + $0x48] sm:$0xff]
    %v77 = vld [vmem:[%s0 + $0x50] sm:$0xff]
    %v78 = vld [vmem:[%s0 + $0x58] sm:$0xff]
    %v79 = vld [vmem:[%s0 + $0x60] sm:$0xff]
    %v80 = vld [vmem:[%s0 + $0x68] sm:$0xff]
    %v81 = vld [vmem:[%s0 + $0x70] sm:$0xff]
    %v82 = vld [vmem:[%s0 + $0x78] sm:$0xff]
    %v83 = vpack.c.bf16 %v68, %v67
    %v84 = vpack.c.bf16 %v70, %v69
    %v85 = vpack.c.bf16 %v72, %v71
    %v86 = vpack.c.bf16 %v74, %v73
    %v87 = vpack.c.bf16 %v76, %v75
    %v88 = vpack.c.bf16 %v78, %v77
    %v89 = vpack.c.bf16 %v80, %v79
    %v90 = vpack.c.bf16 %v82, %v81
    %v91 = vld [vmem:[%s1] sm:$0xf]
    %v92 = vld [vmem:[%s1 + $0x4] sm:$0xf]
    %v93 = vld [vmem:[%s1 + $0x8] sm:$0xf]
    %v94 = vld [vmem:[%s1 + $0xc] sm:$0xf]
    %v95 = vld [vmem:[%s1 + $0x10] sm:$0xf]
    %v96 = vld [vmem:[%s1 + $0x14] sm:$0xf]
    %v97 = vld [vmem:[%s1 + $0x18] sm:$0xf]
    %v98 = vld [vmem:[%s1 + $0x1c] sm:$0xf]
    %v107 = vunpack.c.l.b16 %v91
    %v108 = vunpack.c.l.b16 %v92
    %v109 = vunpack.c.l.b16 %v93
    %v110 = vunpack.c.l.b16 %v94
    %v111 = vunpack.c.l.b16 %v95
    %v112 = vunpack.c.l.b16 %v96
    %v113 = vunpack.c.l.b16 %v97
    %v114 = vunpack.c.l.b16 %v98
    %v115 = vpack.c.b16 %v108, %v107
    %v116 = vpack.c.b16 %v110, %v109
    %v117 = vpack.c.b16 %v112, %v111
    %v118 = vpack.c.b16 %v114, %v113
    %vm123 = vcmask 523264
    %v125 = vsel %vm123, %v83, 0
    %v128 = vsel %vm123, %v84, 0
    %v131 = vsel %vm123, %v85, 0
    %v134 = vsel %vm123, %v86, 0
    %v137 = vsel %vm123, %v87, 0
    %v140 = vsel %vm123, %v88, 0
    %v143 = vsel %vm123, %v89, 0
    %v146 = vsel %vm123, %v90, 0
    %148 = vmatprep.subr.bf16.mxu0 0
    %149 = vmatpush1.bf16.msra.mxu0 %v115
    %150 = vmatprep.subr.bf16.mxu0 0
    %151 = vmatpush1.bf16.msra.mxu0 %v116
    %152 = vmatprep.subr.bf16.mxu0 0
    %153 = vmatpush1.bf16.msra.mxu0 %v117
    %154 = vmatprep.subr.bf16.mxu0 0
    %155 = vmatpush1.bf16.msra.mxu0 %v118
    %156 = vmatprep.subr.bf16.mxu0 0
    %157 = vmatpush1.bf16.msra.mxu0 0
    %158 = vmatprep.subr.bf16.mxu0 0
    %159 = vmatpush1.bf16.msra.mxu0 0
    %160 = vmatprep.subr.bf16.mxu0 0
    %161 = vmatpush1.bf16.msra.mxu0 0
    %162 = vmatprep.subr.bf16.mxu0 0
    %163 = vmatpush1.bf16.msra.mxu0 0
    %164 = vmatprep.subr.bf16.mxu0 0
    %165 = vmatpush1.bf16.msra.mxu0 0
    %166 = vmatprep.subr.bf16.mxu0 0
    %167 = vmatpush1.bf16.msra.mxu0 0
    %168 = vmatprep.subr.bf16.mxu0 0
    %169 = vmatpush1.bf16.msra.mxu0 0
    %170 = vmatprep.subr.bf16.mxu0 0
    %171 = vmatpush1.bf16.msra.mxu0 0
    %172 = vmatprep.subr.bf16.mxu0 0
    %173 = vmatpush1.bf16.msra.mxu0 0
    %174 = vmatprep.subr.bf16.mxu0 0
    %175 = vmatpush1.bf16.msra.mxu0 0
    %176 = vmatprep.subr.bf16.mxu0 0
    %177 = vmatpush1.bf16.msra.mxu0 0
    %178 = vmatprep.subr.bf16.mxu0 0
    %179 = vmatpush1.bf16.msra.mxu0 0
    %180 = vmatprep.mubr.bf16.mxu0 0
    %181 = vmatmul.mubr.bf16.gmra.mrb[0].mxu0 %v125
    %v182 = vpop.f32.mrb[0].mxu0
    %v183 = vadd.f32 0.0, %v182
    %v184 = vpop.f32.mrb[0].mxu0
    %v185 = vpop.f32.mrb[0].mxu0
    %v186 = vadd.f32 0.0, %v185
    %v187 = vpop.f32.mrb[0].mxu0
    %188 = vmatprep.mubr.bf16.mxu0 0
    %189 = vmatmul.mubr.bf16.gmra.mrb[0].mxu0 %v128
    %v190 = vpop.f32.mrb[0].mxu0
    %v191 = vadd.f32 0.0, %v190
    %v192 = vpop.f32.mrb[0].mxu0
    %v193 = vpop.f32.mrb[0].mxu0
    %v194 = vadd.f32 0.0, %v193
    %v195 = vpop.f32.mrb[0].mxu0
    %196 = vmatprep.mubr.bf16.mxu0 0
    %197 = vmatmul.mubr.bf16.gmra.mrb[0].mxu0 %v131
    %v198 = vpop.f32.mrb[0].mxu0
    %v199 = vadd.f32 0.0, %v198
    %v200 = vpop.f32.mrb[0].mxu0
    %v201 = vpop.f32.mrb[0].mxu0
    %v202 = vadd.f32 0.0, %v201
    %v203 = vpop.f32.mrb[0].mxu0
    %204 = vmatprep.mubr.bf16.mxu0 0
    %205 = vmatmul.mubr.bf16.gmra.mrb[0].mxu0 %v134
    %v206 = vpop.f32.mrb[0].mxu0
    %v207 = vadd.f32 0.0, %v206
    %v208 = vpop.f32.mrb[0].mxu0
    %v209 = vpop.f32.mrb[0].mxu0
    %v210 = vadd.f32 0.0, %v209
    %v211 = vpop.f32.mrb[0].mxu0
    %212 = vmatprep.mubr.bf16.mxu0 0
    %213 = vmatmul.mubr.bf16.gmra.mrb[0].mxu0 %v137
    %v214 = vpop.f32.mrb[0].mxu0
    %v215 = vadd.f32 0.0, %v214
    %v216 = vpop.f32.mrb[0].mxu0
    %v217 = vpop.f32.mrb[0].mxu0
    %v218 = vadd.f32 0.0, %v217
    %v219 = vpop.f32.mrb[0].mxu0
    %220 = vmatprep.mubr.bf16.mxu0 0
    %221 = vmatmul.mubr.bf16.gmra.mrb[0].mxu0 %v140
    %v222 = vpop.f32.mrb[0].mxu0
    %v223 = vadd.f32 0.0, %v222
    %v224 = vpop.f32.mrb[0].mxu0
    %v225 = vpop.f32.mrb[0].mxu0
    %v226 = vadd.f32 0.0, %v225
    %v227 = vpop.f32.mrb[0].mxu0
    %228 = vmatprep.mubr.bf16.mxu0 0
    %229 = vmatmul.mubr.bf16.gmra.mrb[0].mxu0 %v143
    %v230 = vpop.f32.mrb[0].mxu0
    %v231 = vadd.f32 0.0, %v230
    %v232 = vpop.f32.mrb[0].mxu0
    %v233 = vpop.f32.mrb[0].mxu0
    %v234 = vadd.f32 0.0, %v233
    %v235 = vpop.f32.mrb[0].mxu0
    %236 = vmatprep.mubr.bf16.mxu0 0
    %237 = vmatmul.mubr.bf16.gmra.mrb[0].mxu0 %v146
    %v238 = vpop.f32.mrb[0].mxu0
    %v239 = vadd.f32 0.0, %v238
    %v240 = vpop.f32.mrb[0].mxu0
    %v241 = vpop.f32.mrb[0].mxu0
    %v242 = vadd.f32 0.0, %v241
    %v243 = vpop.f32.mrb[0].mxu0
    %244 = vdwg.mxu0
    %v245 = vadd.f32 %v51, %v183
    %v246 = vadd.f32 %v52, %v186
    %v247 = vadd.f32 %v53, %v191
    %v248 = vadd.f32 %v54, %v194
    %v249 = vadd.f32 %v55, %v199
    %v250 = vadd.f32 %v56, %v202
    %v251 = vadd.f32 %v57, %v207
    %v252 = vadd.f32 %v58, %v210
    %v253 = vadd.f32 %v59, %v215
    %v254 = vadd.f32 %v60, %v218
    %v255 = vadd.f32 %v61, %v223
    %v256 = vadd.f32 %v62, %v226
    %v257 = vadd.f32 %v63, %v231
    %v258 = vadd.f32 %v64, %v234
    %v259 = vadd.f32 %v65, %v239
    %v260 = vadd.f32 %v66, %v242
    %261 = vst [vmem:[#allocation2] sm:$0xff] %v245
    %262 = vst [vmem:[#allocation2 + $0x8] sm:$0xff] %v246
    %263 = vst [vmem:[#allocation2 + $0x10] sm:$0xff] %v247
    %264 = vst [vmem:[#allocation2 + $0x18] sm:$0xff] %v248
    %265 = vst [vmem:[#allocation2 + $0x20] sm:$0xff] %v249
    %266 = vst [vmem:[#allocation2 + $0x28] sm:$0xff] %v250
    %267 = vst [vmem:[#allocation2 + $0x30] sm:$0xff] %v251
    %268 = vst [vmem:[#allocation2 + $0x38] sm:$0xff] %v252
    %269 = vst [vmem:[#allocation2 + $0x40] sm:$0xff] %v253
    %270 = vst [vmem:[#allocation2 + $0x48] sm:$0xff] %v254
    %271 = vst [vmem:[#allocation2 + $0x50] sm:$0xff] %v255
    %272 = vst [vmem:[#allocation2 + $0x58] sm:$0xff] %v256
    %273 = vst [vmem:[#allocation2 + $0x60] sm:$0xff] %v257
    %274 = vst [vmem:[#allocation2 + $0x68] sm:$0xff] %v258
    %275 = vst [vmem:[#allocation2 + $0x70] sm:$0xff] %v259
    %276 = vst [vmem:[#allocation2 + $0x78] sm:$0xff] %v260
    // Predicated region
    $region34: #{tpu_custom_call.1} parent=1 // pred_check
      %p277 = pneg %p31
    $region35: #{tpu_custom_call.1} parent=1 // pred_check_branch
      %279 = sbr.rel (%p277) target = $region37
    $region36: #{tpu_custom_call.1} parent=1 // pred_region
      %v280 = vld [vmem:[#allocation2] sm:$0xff]
      %v281 = vld [vmem:[#allocation2 + $0x8] sm:$0xff]
      %v282 = vld [vmem:[#allocation2 + $0x10] sm:$0xff]
      %v283 = vld [vmem:[#allocation2 + $0x18] sm:$0xff]
      %v284 = vld [vmem:[#allocation2 + $0x20] sm:$0xff]
      %v285 = vld [vmem:[#allocation2 + $0x28] sm:$0xff]
      %v286 = vld [vmem:[#allocation2 + $0x30] sm:$0xff]
      %v287 = vld [vmem:[#allocation2 + $0x38] sm:$0xff]
      %v288 = vld [vmem:[#allocation2 + $0x40] sm:$0xff]
      %v289 = vld [vmem:[#allocation2 + $0x48] sm:$0xff]
      %v290 = vld [vmem:[#allocation2 + $0x50] sm:$0xff]
      %v291 = vld [vmem:[#allocation2 + $0x58] sm:$0xff]
      %v292 = vld [vmem:[#allocation2 + $0x60] sm:$0xff]
      %v293 = vld [vmem:[#allocation2 + $0x68] sm:$0xff]
      %v294 = vld [vmem:[#allocation2 + $0x70] sm:$0xff]
      %v295 = vld [vmem:[#allocation2 + $0x78] sm:$0xff]
      %v296 = vld [vmem:[%s2] sm:$0x1]
      %v298 = vlaneseq
      %v299 = vshrl.u32 %v298, 7
      %v300 = vsub.s32 0, %v299
      %v301 = vrot.slane %v296, %v300
      %v303 = vadd.f32 %v280, %v301
      %v304 = vadd.f32 %v281, %v301
      %v305 = vadd.f32 %v282, %v301
      %v306 = vadd.f32 %v283, %v301
      %v307 = vadd.f32 %v284, %v301
      %v308 = vadd.f32 %v285, %v301
      %v309 = vadd.f32 %v286, %v301
      %v310 = vadd.f32 %v287, %v301
      %v311 = vadd.f32 %v288, %v301
      %v312 = vadd.f32 %v289, %v301
      %v313 = vadd.f32 %v290, %v301
      %v314 = vadd.f32 %v291, %v301
      %v315 = vadd.f32 %v292, %v301
      %v316 = vadd.f32 %v293, %v301
      %v317 = vadd.f32 %v294, %v301
      %v318 = vadd.f32 %v295, %v301
      %v319 = vmax.f32 %v303, 0.0
      %v320 = vmax.f32 %v304, 0.0
      %v321 = vmax.f32 %v305, 0.0
      %v322 = vmax.f32 %v306, 0.0
      %v323 = vmax.f32 %v307, 0.0
      %v324 = vmax.f32 %v308, 0.0
      %v325 = vmax.f32 %v309, 0.0
      %v326 = vmax.f32 %v310, 0.0
      %v327 = vmax.f32 %v311, 0.0
      %v328 = vmax.f32 %v312, 0.0
      %v329 = vmax.f32 %v313, 0.0
      %v330 = vmax.f32 %v314, 0.0
      %v331 = vmax.f32 %v315, 0.0
      %v332 = vmax.f32 %v316, 0.0
      %v333 = vmax.f32 %v317, 0.0
      %v334 = vmax.f32 %v318, 0.0
      %v335 = vpack.c.bf16 %v320, %v319
      %v336 = vpack.c.bf16 %v322, %v321
      %v337 = vpack.c.bf16 %v324, %v323
      %v338 = vpack.c.bf16 %v326, %v325
      %v339 = vpack.c.bf16 %v328, %v327
      %v340 = vpack.c.bf16 %v330, %v329
      %v341 = vpack.c.bf16 %v332, %v331
      %v342 = vpack.c.bf16 %v334, %v333
      %v351 = vunpack.c.l.b16 %v335
      %v352 = vunpack.c.h.b16 %v335
      %v353 = vunpack.c.l.b16 %v336
      %v354 = vunpack.c.h.b16 %v336
      %v355 = vunpack.c.l.b16 %v337
      %v356 = vunpack.c.h.b16 %v337
      %v357 = vunpack.c.l.b16 %v338
      %v358 = vunpack.c.h.b16 %v338
      %v359 = vunpack.c.l.b16 %v339
      %v360 = vunpack.c.h.b16 %v339
      %v361 = vunpack.c.l.b16 %v340
      %v362 = vunpack.c.h.b16 %v340
      %v363 = vunpack.c.l.b16 %v341
      %v364 = vunpack.c.h.b16 %v341
      %v365 = vunpack.c.l.b16 %v342
      %v366 = vunpack.c.h.b16 %v342
      %v367 = vpack.c.b16 %v351, %v351
      %v368 = vpack.c.b16 %v352, %v352
      %v369 = vpack.c.b16 %v353, %v353
      %v370 = vpack.c.b16 %v354, %v354
      %v371 = vpack.c.b16 %v355, %v355
      %v372 = vpack.c.b16 %v356, %v356
      %v373 = vpack.c.b16 %v357, %v357
      %v374 = vpack.c.b16 %v358, %v358
      %v375 = vpack.c.b16 %v359, %v359
      %v376 = vpack.c.b16 %v360, %v360
      %v377 = vpack.c.b16 %v361, %v361
      %v378 = vpack.c.b16 %v362, %v362
      %v379 = vpack.c.b16 %v363, %v363
      %v380 = vpack.c.b16 %v364, %v364
      %v381 = vpack.c.b16 %v365, %v365
      %v382 = vpack.c.b16 %v366, %v366
      %399 = vst [vmem:[#allocation3] sm:$0xf] %v367
      %400 = vst [vmem:[#allocation3 + $0x4] sm:$0xf] %v368
      %401 = vst [vmem:[#allocation3 + $0x8] sm:$0xf] %v369
      %402 = vst [vmem:[#allocation3 + $0xc] sm:$0xf] %v370
      %403 = vst [vmem:[#allocation3 + $0x10] sm:$0xf] %v371
      %404 = vst [vmem:[#allocation3 + $0x14] sm:$0xf] %v372
      %405 = vst [vmem:[#allocation3 + $0x18] sm:$0xf] %v373
      %406 = vst [vmem:[#allocation3 + $0x1c] sm:$0xf] %v374
      %407 = vst [vmem:[#allocation3 + $0x20] sm:$0xf] %v375
      %408 = vst [vmem:[#allocation3 + $0x24] sm:$0xf] %v376
      %409 = vst [vmem:[#allocation3 + $0x28] sm:$0xf] %v377
      %410 = vst [vmem:[#allocation3 + $0x2c] sm:$0xf] %v378
      %411 = vst [vmem:[#allocation3 + $0x30] sm:$0xf] %v379
      %412 = vst [vmem:[#allocation3 + $0x34] sm:$0xf] %v380
      %413 = vst [vmem:[#allocation3 + $0x38] sm:$0xf] %v381
      %414 = vst [vmem:[#allocation3 + $0x3c] sm:$0xf] %v382
      %v415 = vld [vmem:[%s3] sm:$0xf]
      %v416 = vld [vmem:[%s3 + $0x4] sm:$0xf]
      %v417 = vld [vmem:[%s3 + $0x8] sm:$0xf]
      %v418 = vld [vmem:[%s3 + $0xc] sm:$0xf]
      %v419 = vld [vmem:[%s3 + $0x10] sm:$0xf]
      %v420 = vld [vmem:[%s3 + $0x14] sm:$0xf]
      %v421 = vld [vmem:[%s3 + $0x18] sm:$0xf]
      %v422 = vld [vmem:[%s3 + $0x1c] sm:$0xf]
      %v423 = vld [vmem:[%s3 + $0x20] sm:$0xf]
      %v424 = vld [vmem:[%s3 + $0x24] sm:$0xf]
      %v425 = vld [vmem:[%s3 + $0x28] sm:$0xf]
      %v426 = vld [vmem:[%s3 + $0x2c] sm:$0xf]
      %v427 = vld [vmem:[%s3 + $0x30] sm:$0xf]
      %v428 = vld [vmem:[%s3 + $0x34] sm:$0xf]
      %v429 = vld [vmem:[%s3 + $0x38] sm:$0xf]
      %v430 = vld [vmem:[%s3 + $0x3c] sm:$0xf]
      %v431 = vld [vmem:[%s4] sm:$0x1]
      %v433 = vlaneseq
      %v434 = vshrl.u32 %v433, 7
      %v435 = vsub.s32 0, %v434
      %v436 = vrot.slane %v431, %v435
      %v454 = vunpack.c.l.b16 %v415
      %v455 = vunpack.c.l.b16 %v416
      %v456 = vunpack.c.l.b16 %v417
      %v457 = vunpack.c.l.b16 %v418
      %v458 = vunpack.c.l.b16 %v419
      %v459 = vunpack.c.l.b16 %v420
      %v460 = vunpack.c.l.b16 %v421
      %v461 = vunpack.c.l.b16 %v422
      %v462 = vunpack.c.l.b16 %v423
      %v463 = vunpack.c.l.b16 %v424
      %v464 = vunpack.c.l.b16 %v425
      %v465 = vunpack.c.l.b16 %v426
      %v466 = vunpack.c.l.b16 %v427
      %v467 = vunpack.c.l.b16 %v428
      %v468 = vunpack.c.l.b16 %v429
      %v469 = vunpack.c.l.b16 %v430
      %v470 = vpack.c.b16 %v455, %v454
      %v471 = vpack.c.b16 %v457, %v456
      %v472 = vpack.c.b16 %v459, %v458
      %v473 = vpack.c.b16 %v461, %v460
      %v474 = vpack.c.b16 %v463, %v462
      %v475 = vpack.c.b16 %v465, %v464
      %v476 = vpack.c.b16 %v467, %v466
      %v477 = vpack.c.b16 %v469, %v468
      %486 = vmatprep.subr.bf16.mxu0 0
      %487 = vmatpush1.bf16.msra.mxu0 %v470
      %488 = vmatprep.subr.bf16.mxu0 0
      %489 = vmatpush1.bf16.msra.mxu0 %v471
      %490 = vmatprep.subr.bf16.mxu0 0
      %491 = vmatpush1.bf16.msra.mxu0 %v472
      %492 = vmatprep.subr.bf16.mxu0 0
      %493 = vmatpush1.bf16.msra.mxu0 %v473
      %494 = vmatprep.subr.bf16.mxu0 0
      %495 = vmatpush1.bf16.msra.mxu0 %v474
      %496 = vmatprep.subr.bf16.mxu0 0
      %497 = vmatpush1.bf16.msra.mxu0 %v475
      %498 = vmatprep.subr.bf16.mxu0 0
      %499 = vmatpush1.bf16.msra.mxu0 %v476
      %500 = vmatprep.subr.bf16.mxu0 0
      %501 = vmatpush1.bf16.msra.mxu0 %v477
      %502 = vmatprep.subr.bf16.mxu0 0
      %503 = vmatpush1.bf16.msra.mxu0 0
      %504 = vmatprep.subr.bf16.mxu0 0
      %505 = vmatpush1.bf16.msra.mxu0 0
      %506 = vmatprep.subr.bf16.mxu0 0
      %507 = vmatpush1.bf16.msra.mxu0 0
      %508 = vmatprep.subr.bf16.mxu0 0
      %509 = vmatpush1.bf16.msra.mxu0 0
      %510 = vmatprep.subr.bf16.mxu0 0
      %511 = vmatpush1.bf16.msra.mxu0 0
      %512 = vmatprep.subr.bf16.mxu0 0
      %513 = vmatpush1.bf16.msra.mxu0 0
      %514 = vmatprep.subr.bf16.mxu0 0
      %515 = vmatpush1.bf16.msra.mxu0 0
      %516 = vmatprep.subr.bf16.mxu0 0
      %517 = vmatpush1.bf16.msra.mxu0 0
      %518 = vmatprep.mubr.bf16.mxu0 0
      %519 = vmatmul.mubr.bf16.gmra.mrb[0].mxu0 %v335
      %v520 = vpop.f32.mrb[0].mxu0
      %v521 = vadd.f32 %v436, %v520
      %v522 = vpop.f32.mrb[0].mxu0
      %v523 = vpop.f32.mrb[0].mxu0
      %v524 = vadd.f32 %v436, %v523
      %v525 = vpop.f32.mrb[0].mxu0
      %526 = vmatprep.mubr.bf16.mxu0 0
      %527 = vmatmul.mubr.bf16.gmra.mrb[0].mxu0 %v336
      %v528 = vpop.f32.mrb[0].mxu0
      %v529 = vadd.f32 %v436, %v528
      %v530 = vpop.f32.mrb[0].mxu0
      %v531 = vpop.f32.mrb[0].mxu0
      %v532 = vadd.f32 %v436, %v531
      %v533 = vpop.f32.mrb[0].mxu0
      %534 = vmatprep.mubr.bf16.mxu0 0
      %535 = vmatmul.mubr.bf16.gmra.mrb[0].mxu0 %v337
      %v536 = vpop.f32.mrb[0].mxu0
      %v537 = vadd.f32 %v436, %v536
      %v538 = vpop.f32.mrb[0].mxu0
      %v539 = vpop.f32.mrb[0].mxu0
      %v540 = vadd.f32 %v436, %v539
      %v541 = vpop.f32.mrb[0].mxu0
      %542 = vmatprep.mubr.bf16.mxu0 0
      %543 = vmatmul.mubr.bf16.gmra.mrb[0].mxu0 %v338
      %v544 = vpop.f32.mrb[0].mxu0
      %v545 = vadd.f32 %v436, %v544
      %v546 = vpop.f32.mrb[0].mxu0
      %v547 = vpop.f32.mrb[0].mxu0
      %v548 = vadd.f32 %v436, %v547
      %v549 = vpop.f32.mrb[0].mxu0
      %550 = vmatprep.mubr.bf16.mxu0 0
      %551 = vmatmul.mubr.bf16.gmra.mrb[0].mxu0 %v339
      %v552 = vpop.f32.mrb[0].mxu0
      %v553 = vadd.f32 %v436, %v552
      %v554 = vpop.f32.mrb[0].mxu0
      %v555 = vpop.f32.mrb[0].mxu0
      %v556 = vadd.f32 %v436, %v555
      %v557 = vpop.f32.mrb[0].mxu0
      %558 = vmatprep.mubr.bf16.mxu0 0
      %559 = vmatmul.mubr.bf16.gmra.mrb[0].mxu0 %v340
      %v560 = vpop.f32.mrb[0].mxu0
      %v561 = vadd.f32 %v436, %v560
      %v562 = vpop.f32.mrb[0].mxu0
      %v563 = vpop.f32.mrb[0].mxu0
      %v564 = vadd.f32 %v436, %v563
      %v565 = vpop.f32.mrb[0].mxu0
      %566 = vmatprep.mubr.bf16.mxu0 0
      %567 = vmatmul.mubr.bf16.gmra.mrb[0].mxu0 %v341
      %v568 = vpop.f32.mrb[0].mxu0
      %v569 = vadd.f32 %v436, %v568
      %v570 = vpop.f32.mrb[0].mxu0
      %v571 = vpop.f32.mrb[0].mxu0
      %v572 = vadd.f32 %v436, %v571
      %v573 = vpop.f32.mrb[0].mxu0
      %574 = vmatprep.mubr.bf16.mxu0 0
      %575 = vmatmul.mubr.bf16.gmra.mrb[0].mxu0 %v342
      %v576 = vpop.f32.mrb[0].mxu0
      %v577 = vadd.f32 %v436, %v576
      %v578 = vpop.f32.mrb[0].mxu0
      %v579 = vpop.f32.mrb[0].mxu0
      %v580 = vadd.f32 %v436, %v579
      %v581 = vpop.f32.mrb[0].mxu0
      %582 = vdwg.mxu0
      %v583 = vmax.f32 %v521, 0.0
      %v584 = vmax.f32 %v524, 0.0
      %v585 = vmax.f32 %v529, 0.0
      %v586 = vmax.f32 %v532, 0.0
      %v587 = vmax.f32 %v537, 0.0
      %v588 = vmax.f32 %v540, 0.0
      %v589 = vmax.f32 %v545, 0.0
      %v590 = vmax.f32 %v548, 0.0
      %v591 = vmax.f32 %v553, 0.0
      %v592 = vmax.f32 %v556, 0.0
      %v593 = vmax.f32 %v561, 0.0
      %v594 = vmax.f32 %v564, 0.0
      %v595 = vmax.f32 %v569, 0.0
      %v596 = vmax.f32 %v572, 0.0
      %v597 = vmax.f32 %v577, 0.0
      %v598 = vmax.f32 %v580, 0.0
      %v599 = vpack.c.bf16 %v584, %v583
      %v600 = vpack.c.bf16 %v586, %v585
      %v601 = vpack.c.bf16 %v588, %v587
      %v602 = vpack.c.bf16 %v590, %v589
      %v603 = vpack.c.bf16 %v592, %v591
      %v604 = vpack.c.bf16 %v594, %v593
      %v605 = vpack.c.bf16 %v596, %v595
      %v606 = vpack.c.bf16 %v598, %v597
      %v607 = vld [vmem:[%s5] sm:$0xf]
      %v608 = vld [vmem:[%s5 + $0x4] sm:$0xf]
      %v609 = vld [vmem:[%s5 + $0x8] sm:$0xf]
      %v610 = vld [vmem:[%s5 + $0xc] sm:$0xf]
      %v611 = vld [vmem:[%s5 + $0x10] sm:$0xf]
      %v612 = vld [vmem:[%s5 + $0x14] sm:$0xf]
      %v613 = vld [vmem:[%s5 + $0x18] sm:$0xf]
      %v614 = vld [vmem:[%s5 + $0x1c] sm:$0xf]
      %v615 = vld [vmem:[%s5 + $0x20] sm:$0xf]
      %v616 = vld [vmem:[%s5 + $0x24] sm:$0xf]
      %v617 = vld [vmem:[%s5 + $0x28] sm:$0xf]
      %v618 = vld [vmem:[%s5 + $0x2c] sm:$0xf]
      %v619 = vld [vmem:[%s5 + $0x30] sm:$0xf]
      %v620 = vld [vmem:[%s5 + $0x34] sm:$0xf]
      %v621 = vld [vmem:[%s5 + $0x38] sm:$0xf]
      %v622 = vld [vmem:[%s5 + $0x3c] sm:$0xf]
      %v623 = vld [vmem:[%s6] sm:$0x1]
      %v625 = vlaneseq
      %v626 = vshrl.u32 %v625, 7
      %v627 = vsub.s32 0, %v626
      %v628 = vrot.slane %v623, %v627
      %v646 = vunpack.c.l.b16 %v607
      %v647 = vunpack.c.l.b16 %v608
      %v648 = vunpack.c.l.b16 %v609
      %v649 = vunpack.c.l.b16 %v610
      %v650 = vunpack.c.l.b16 %v611
      %v651 = vunpack.c.l.b16 %v612
      %v652 = vunpack.c.l.b16 %v613
      %v653 = vunpack.c.l.b16 %v614
      %v654 = vunpack.c.l.b16 %v615
      %v655 = vunpack.c.l.b16 %v616
      %v656 = vunpack.c.l.b16 %v617
      %v657 = vunpack.c.l.b16 %v618
      %v658 = vunpack.c.l.b16 %v619
      %v659 = vunpack.c.l.b16 %v620
      %v660 = vunpack.c.l.b16 %v621
      %v661 = vunpack.c.l.b16 %v622
      %v662 = vpack.c.b16 %v647, %v646
      %v663 = vpack.c.b16 %v649, %v648
      %v664 = vpack.c.b16 %v651, %v650
      %v665 = vpack.c.b16 %v653, %v652
      %v666 = vpack.c.b16 %v655, %v654
      %v667 = vpack.c.b16 %v657, %v656
      %v668 = vpack.c.b16 %v659, %v658
      %v669 = vpack.c.b16 %v661, %v660
      %678 = vmatprep.subr.bf16.mxu0 0
      %679 = vmatpush1.bf16.msra.mxu0 %v662
      %680 = vmatprep.subr.bf16.mxu0 0
      %681 = vmatpush1.bf16.msra.mxu0 %v663
      %682 = vmatprep.subr.bf16.mxu0 0
      %683 = vmatpush1.bf16.msra.mxu0 %v664
      %684 = vmatprep.subr.bf16.mxu0 0
      %685 = vmatpush1.bf16.msra.mxu0 %v665
      %686 = vmatprep.subr.bf16.mxu0 0
      %687 = vmatpush1.bf16.msra.mxu0 %v666
      %688 = vmatprep.subr.bf16.mxu0 0
      %689 = vmatpush1.bf16.msra.mxu0 %v667
      %690 = vmatprep.subr.bf16.mxu0 0
      %691 = vmatpush1.bf16.msra.mxu0 %v668
      %692 = vmatprep.subr.bf16.mxu0 0
      %693 = vmatpush1.bf16.msra.mxu0 %v669
      %694 = vmatprep.subr.bf16.mxu0 0
      %695 = vmatpush1.bf16.msra.mxu0 0
      %696 = vmatprep.subr.bf16.mxu0 0
      %697 = vmatpush1.bf16.msra.mxu0 0
      %698 = vmatprep.subr.bf16.mxu0 0
      %699 = vmatpush1.bf16.msra.mxu0 0
      %700 = vmatprep.subr.bf16.mxu0 0
      %701 = vmatpush1.bf16.msra.mxu0 0
      %702 = vmatprep.subr.bf16.mxu0 0
      %703 = vmatpush1.bf16.msra.mxu0 0
      %704 = vmatprep.subr.bf16.mxu0 0
      %705 = vmatpush1.bf16.msra.mxu0 0
      %706 = vmatprep.subr.bf16.mxu0 0
      %707 = vmatpush1.bf16.msra.mxu0 0
      %708 = vmatprep.subr.bf16.mxu0 0
      %709 = vmatpush1.bf16.msra.mxu0 0
      %710 = vmatprep.mubr.bf16.mxu0 0
      %711 = vmatmul.mubr.bf16.gmra.mrb[0].mxu0 %v599
      %v712 = vpop.f32.mrb[0].mxu0
      %v713 = vadd.f32 %v628, %v712
      %v714 = vpop.f32.mrb[0].mxu0
      %v715 = vpop.f32.mrb[0].mxu0
      %v716 = vadd.f32 %v628, %v715
      %v717 = vpop.f32.mrb[0].mxu0
      %718 = vmatprep.mubr.bf16.mxu0 0
      %719 = vmatmul.mubr.bf16.gmra.mrb[0].mxu0 %v600
      %v720 = vpop.f32.mrb[0].mxu0
      %v721 = vadd.f32 %v628, %v720
      %v722 = vpop.f32.mrb[0].mxu0
      %v723 = vpop.f32.mrb[0].mxu0
      %v724 = vadd.f32 %v628, %v723
      %v725 = vpop.f32.mrb[0].mxu0
      %726 = vmatprep.mubr.bf16.mxu0 0
      %727 = vmatmul.mubr.bf16.gmra.mrb[0].mxu0 %v601
      %v728 = vpop.f32.mrb[0].mxu0
      %v729 = vadd.f32 %v628, %v728
      %v730 = vpop.f32.mrb[0].mxu0
      %v731 = vpop.f32.mrb[0].mxu0
      %v732 = vadd.f32 %v628, %v731
      %v733 = vpop.f32.mrb[0].mxu0
      %734 = vmatprep.mubr.bf16.mxu0 0
      %735 = vmatmul.mubr.bf16.gmra.mrb[0].mxu0 %v602
      %v736 = vpop.f32.mrb[0].mxu0
      %v737 = vadd.f32 %v628, %v736
      %v738 = vpop.f32.mrb[0].mxu0
      %v739 = vpop.f32.mrb[0].mxu0
      %v740 = vadd.f32 %v628, %v739
      %v741 = vpop.f32.mrb[0].mxu0
      %742 = vmatprep.mubr.bf16.mxu0 0
      %743 = vmatmul.mubr.bf16.gmra.mrb[0].mxu0 %v603
      %v744 = vpop.f32.mrb[0].mxu0
      %v745 = vadd.f32 %v628, %v744
      %v746 = vpop.f32.mrb[0].mxu0
      %v747 = vpop.f32.mrb[0].mxu0
      %v748 = vadd.f32 %v628, %v747
      %v749 = vpop.f32.mrb[0].mxu0
      %750 = vmatprep.mubr.bf16.mxu0 0
      %751 = vmatmul.mubr.bf16.gmra.mrb[0].mxu0 %v604
      %v752 = vpop.f32.mrb[0].mxu0
      %v753 = vadd.f32 %v628, %v752
      %v754 = vpop.f32.mrb[0].mxu0
      %v755 = vpop.f32.mrb[0].mxu0
      %v756 = vadd.f32 %v628, %v755
      %v757 = vpop.f32.mrb[0].mxu0
      %758 = vmatprep.mubr.bf16.mxu0 0
      %759 = vmatmul.mubr.bf16.gmra.mrb[0].mxu0 %v605
      %v760 = vpop.f32.mrb[0].mxu0
      %v761 = vadd.f32 %v628, %v760
      %v762 = vpop.f32.mrb[0].mxu0
      %v763 = vpop.f32.mrb[0].mxu0
      %v764 = vadd.f32 %v628, %v763
      %v765 = vpop.f32.mrb[0].mxu0
      %766 = vmatprep.mubr.bf16.mxu0 0
      %767 = vmatmul.mubr.bf16.gmra.mrb[0].mxu0 %v606
      %v768 = vpop.f32.mrb[0].mxu0
      %v769 = vadd.f32 %v628, %v768
      %v770 = vpop.f32.mrb[0].mxu0
      %v771 = vpop.f32.mrb[0].mxu0
      %v772 = vadd.f32 %v628, %v771
      %v773 = vpop.f32.mrb[0].mxu0
      %774 = vdwg.mxu0
      %v775 = vmul.f32 %v713, %v713
      %v776 = vmul.f32 %v716, %v716
      %v777 = vmul.f32 %v721, %v721
      %v778 = vmul.f32 %v724, %v724
      %v779 = vmul.f32 %v729, %v729
      %v780 = vmul.f32 %v732, %v732
      %v781 = vmul.f32 %v737, %v737
      %v782 = vmul.f32 %v740, %v740
      %v783 = vmul.f32 %v745, %v745
      %v784 = vmul.f32 %v748, %v748
      %v785 = vmul.f32 %v753, %v753
      %v786 = vmul.f32 %v756, %v756
      %v787 = vmul.f32 %v761, %v761
      %v788 = vmul.f32 %v764, %v764
      %v789 = vmul.f32 %v769, %v769
      %v790 = vmul.f32 %v772, %v772
      %791 = vadd.xlane.f32.xlu0 %v775
      %v792 = vpop.xlane.xlu0 %791
      %793 = vadd.xlane.f32.xlu0 %v776
      %v794 = vpop.xlane.xlu0 %793
      %795 = vadd.xlane.f32.xlu0 %v777
      %v796 = vpop.xlane.xlu0 %795
      %797 = vadd.xlane.f32.xlu0 %v778
      %v798 = vpop.xlane.xlu0 %797
      %799 = vadd.xlane.f32.xlu0 %v779
      %v800 = vpop.xlane.xlu0 %799
      %801 = vadd.xlane.f32.xlu0 %v780
      %v802 = vpop.xlane.xlu0 %801
      %803 = vadd.xlane.f32.xlu0 %v781
      %v804 = vpop.xlane.xlu0 %803
      %805 = vadd.xlane.f32.xlu0 %v782
      %v806 = vpop.xlane.xlu0 %805
      %807 = vadd.xlane.f32.xlu0 %v783
      %v808 = vpop.xlane.xlu0 %807
      %809 = vadd.xlane.f32.xlu0 %v784
      %v810 = vpop.xlane.xlu0 %809
      %811 = vadd.xlane.f32.xlu0 %v785
      %v812 = vpop.xlane.xlu0 %811
      %813 = vadd.xlane.f32.xlu0 %v786
      %v814 = vpop.xlane.xlu0 %813
      %815 = vadd.xlane.f32.xlu0 %v787
      %v816 = vpop.xlane.xlu0 %815
      %817 = vadd.xlane.f32.xlu0 %v788
      %v818 = vpop.xlane.xlu0 %817
      %819 = vadd.xlane.f32.xlu0 %v789
      %v820 = vpop.xlane.xlu0 %819
      %821 = vadd.xlane.f32.xlu0 %v790
      %v822 = vpop.xlane.xlu0 %821
      %v823 = vmax.f32 %v792, 1e-24
      %v824 = vmax.f32 %v794, 1e-24
      %v825 = vmax.f32 %v796, 1e-24
      %v826 = vmax.f32 %v798, 1e-24
      %v827 = vmax.f32 %v800, 1e-24
      %v828 = vmax.f32 %v802, 1e-24
      %v829 = vmax.f32 %v804, 1e-24
      %v830 = vmax.f32 %v806, 1e-24
      %v831 = vmax.f32 %v808, 1e-24
      %v832 = vmax.f32 %v810, 1e-24
      %v833 = vmax.f32 %v812, 1e-24
      %v834 = vmax.f32 %v814, 1e-24
      %v835 = vmax.f32 %v816, 1e-24
      %v836 = vmax.f32 %v818, 1e-24
      %v837 = vmax.f32 %v820, 1e-24
      %v838 = vmax.f32 %v822, 1e-24
      %v839 = vrsqrt.pop %v823
      %v840 = vrsqrt.pop %v824
      %v841 = vrsqrt.pop %v825
      %v842 = vrsqrt.pop %v826
      %v843 = vrsqrt.pop %v827
      %v844 = vrsqrt.pop %v828
      %v845 = vrsqrt.pop %v829
      %v846 = vrsqrt.pop %v830
      %v847 = vrsqrt.pop %v831
      %v848 = vrsqrt.pop %v832
      %v849 = vrsqrt.pop %v833
      %v850 = vrsqrt.pop %v834
      %v851 = vrsqrt.pop %v835
      %v852 = vrsqrt.pop %v836
      %v853 = vrsqrt.pop %v837
      %v854 = vrsqrt.pop %v838
      %v855 = vmul.f32 %v713, %v839
      %v856 = vmul.f32 %v716, %v840
      %v857 = vmul.f32 %v721, %v841
      %v858 = vmul.f32 %v724, %v842
      %v859 = vmul.f32 %v729, %v843
      %v860 = vmul.f32 %v732, %v844
      %v861 = vmul.f32 %v737, %v845
      %v862 = vmul.f32 %v740, %v846
      %v863 = vmul.f32 %v745, %v847
      %v864 = vmul.f32 %v748, %v848
      %v865 = vmul.f32 %v753, %v849
      %v866 = vmul.f32 %v756, %v850
      %v867 = vmul.f32 %v761, %v851
      %v868 = vmul.f32 %v764, %v852
      %v869 = vmul.f32 %v769, %v853
      %v870 = vmul.f32 %v772, %v854
      %v871 = vpack.c.bf16 %v856, %v855
      %v872 = vpack.c.bf16 %v858, %v857
      %v873 = vpack.c.bf16 %v860, %v859
      %v874 = vpack.c.bf16 %v862, %v861
      %v875 = vpack.c.bf16 %v864, %v863
      %v876 = vpack.c.bf16 %v866, %v865
      %v877 = vpack.c.bf16 %v868, %v867
      %v878 = vpack.c.bf16 %v870, %v869
      %v887 = vunpack.c.l.b16 %v871
      %v888 = vunpack.c.h.b16 %v871
      %v889 = vunpack.c.l.b16 %v872
      %v890 = vunpack.c.h.b16 %v872
      %v891 = vunpack.c.l.b16 %v873
      %v892 = vunpack.c.h.b16 %v873
      %v893 = vunpack.c.l.b16 %v874
      %v894 = vunpack.c.h.b16 %v874
      %v895 = vunpack.c.l.b16 %v875
      %v896 = vunpack.c.h.b16 %v875
      %v897 = vunpack.c.l.b16 %v876
      %v898 = vunpack.c.h.b16 %v876
      %v899 = vunpack.c.l.b16 %v877
      %v900 = vunpack.c.h.b16 %v877
      %v901 = vunpack.c.l.b16 %v878
      %v902 = vunpack.c.h.b16 %v878
      %v903 = vpack.c.b16 %v887, %v887
      %v904 = vpack.c.b16 %v888, %v888
      %v905 = vpack.c.b16 %v889, %v889
      %v906 = vpack.c.b16 %v890, %v890
      %v907 = vpack.c.b16 %v891, %v891
      %v908 = vpack.c.b16 %v892, %v892
      %v909 = vpack.c.b16 %v893, %v893
      %v910 = vpack.c.b16 %v894, %v894
      %v911 = vpack.c.b16 %v895, %v895
      %v912 = vpack.c.b16 %v896, %v896
      %v913 = vpack.c.b16 %v897, %v897
      %v914 = vpack.c.b16 %v898, %v898
      %v915 = vpack.c.b16 %v899, %v899
      %v916 = vpack.c.b16 %v900, %v900
      %v917 = vpack.c.b16 %v901, %v901
      %v918 = vpack.c.b16 %v902, %v902
      %935 = vst [vmem:[#allocation5] sm:$0xf] %v903
      %936 = vst [vmem:[#allocation5 + $0x4] sm:$0xf] %v904
      %937 = vst [vmem:[#allocation5 + $0x8] sm:$0xf] %v905
      %938 = vst [vmem:[#allocation5 + $0xc] sm:$0xf] %v906
      %939 = vst [vmem:[#allocation5 + $0x10] sm:$0xf] %v907
      %940 = vst [vmem:[#allocation5 + $0x14] sm:$0xf] %v908
      %941 = vst [vmem:[#allocation5 + $0x18] sm:$0xf] %v909
      %942 = vst [vmem:[#allocation5 + $0x1c] sm:$0xf] %v910
      %943 = vst [vmem:[#allocation5 + $0x20] sm:$0xf] %v911
      %944 = vst [vmem:[#allocation5 + $0x24] sm:$0xf] %v912
      %945 = vst [vmem:[#allocation5 + $0x28] sm:$0xf] %v913
      %946 = vst [vmem:[#allocation5 + $0x2c] sm:$0xf] %v914
      %947 = vst [vmem:[#allocation5 + $0x30] sm:$0xf] %v915
      %948 = vst [vmem:[#allocation5 + $0x34] sm:$0xf] %v916
      %949 = vst [vmem:[#allocation5 + $0x38] sm:$0xf] %v917
      %950 = vst [vmem:[#allocation5 + $0x3c] sm:$0xf] %v918
    $region37: #{tpu_custom_call.1} parent=1 // pred_fallthru
      _
    // Predicated region
    $region38: #{tpu_custom_call.1} parent=1 // pred_check
      _
    $region39: #{tpu_custom_call.1} parent=1 // pred_check_branch
      %952 = sbr.rel (0) target = $region41
    $region40: #{tpu_custom_call.1} parent=1 // pred_region
      %s954 = ssub.s32 1024, 1024
      %955 = vsyncadd [#allocation4], %s954
      %s956 = sshll.u32 [#allocation3], 4
      %s957 = int_to_ptr.vmem [resolvable:$true] %s956
      %962 = dma.vmem_to_hbm [thread:$0]  %s957, 1024, %s7, [#allocation4], 64, 64, 4
    $region41: #{tpu_custom_call.1} parent=1 // pred_fallthru
      _
    // Predicated region
    $region42: #{tpu_custom_call.1} parent=1 // pred_check
      _
    $region43: #{tpu_custom_call.1} parent=1 // pred_check_branch
      %964 = sbr.rel (0) target = $region45
    $region44: #{tpu_custom_call.1} parent=1 // pred_region
      %s966 = ssub.s32 1024, 1024
      %967 = vsyncadd [#allocation6], %s966
      %s968 = sshll.u32 [#allocation5], 4
      %s969 = int_to_ptr.vmem [resolvable:$true] %s968
      %974 = dma.vmem_to_hbm [thread:$0]  %s969, 1024, %s8, [#allocation6], 64, 64, 4
    $region45: #{tpu_custom_call.1} parent=1 // pred_fallthru
      _
    // Predicated region
    $region46: #{tpu_custom_call.1} parent=1 // pred_check
      _
    $region47: #{tpu_custom_call.1} parent=1 // pred_check_branch
      %976 = sbr.rel (0) target = $region49
    $region48: #{tpu_custom_call.1} parent=1 // pred_region
      %977 = dma.done [#allocation4], 1024
    $region49: #{tpu_custom_call.1} parent=1 // pred_fallthru
      _
    // Predicated region
    $region50: #{tpu_custom_call.1} parent=1 // pred_check
      _
    $region51: #{tpu_custom_call.1} parent=1 // pred_check_branch
      %979 = sbr.rel (0) target = $region53
    $region52: #{tpu_custom_call.1} parent=1 // pred_region
      %980 = dma.done [#allocation6], 1024
    $region53: #{tpu_custom_call.1} parent=1 // pred_fallthru
      _
    %981 = vsyncpa [#allocation4], 1
    %982 = vsyncpa [#allocation6], 1

// kernel: tpu_custom_call.1
$region0: #{tpu_custom_call.1}
  #allocation0 [shape = 'u32[]', space=smem, size = 0x4, offset = 0x4, fixed_abs, tag = 'smem constant byte address 0x4 - core index']
  #allocation1 [shape = 'u32[144,128]{1,0:T(1,128)}', space=vmem, size = 0x12000, scoped, tag = 'internal scratch']
  #allocation2 [shape = 'f32[128,128]{1,0:T(8,128)}', space=vmem, size = 0x10000, scoped, tag = 'scratch operand']
  %s0 = inlined_call_operand.vmem [shape: f32[128,64], index: 0, kind: input, shape index: {}]
  %s1 = inlined_call_operand.vmem [shape: bf16[64,128], index: 1, kind: input, shape index: {}]
  %s2 = inlined_call_operand.vmem [shape: f32[1,128], index: 2, kind: input, shape index: {}]
  %s3 = inlined_call_operand.vmem [shape: bf16[128,128], index: 3, kind: input, shape index: {}]
  %s4 = inlined_call_operand.vmem [shape: f32[1,128], index: 4, kind: input, shape index: {}]
  %s5 = inlined_call_operand.vmem [shape: bf16[128,128], index: 5, kind: input, shape index: {}]
  %s6 = inlined_call_operand.vmem [shape: f32[1,128], index: 6, kind: input, shape index: {}]
  %s7 = inlined_call_operand.hbm [shape: bf16[128,128], index: 7, kind: output, shape index: {0}]
  %s8 = inlined_call_operand.hbm [shape: bf16[128,128], index: 8, kind: output, shape index: {1}]
  %9 = xla_tuple %s7, %s8
  %s10 = sld [smem:[#allocation0]]
  $region54: #{tpu_custom_call.1} parent=0
    _
  %s12 = ssub.s32 1, %s10
  %s13 = scalar_select 0, %s12, %s10
  $region1: #{tpu_custom_call.1} parent=0
    #allocation3 [shape = 'u8[32768]{0}', space=vmem, size = 0x8000, scoped, tag = 'output window, operand 0, single buffered']
    #allocation4 [shape = 's32[1]{0}', space=sflag, size = 0x4, scoped, tag = 'scoped memory for tpu_custom_call.1']
    #allocation5 [shape = 'u8[32768]{0}', space=vmem, size = 0x8000, scoped, tag = 'output window, operand 1, single buffered']
    #allocation6 [shape = 's32[1]{0}', space=sflag, size = 0x4, scoped, tag = 'scoped memory for tpu_custom_call.1']
    %14 = vsyncpa [#allocation4], 0
    %15 = vsyncpa [#allocation6], 0
    // Predicated region
    $region2: #{tpu_custom_call.1} parent=1 // pred_check
      _
    $region3: #{tpu_custom_call.1} parent=1 // pred_check_branch
      %17 = sbr.rel (0) target = $region5
    $region4: #{tpu_custom_call.1} parent=1 // pred_region
      _
    $region5: #{tpu_custom_call.1} parent=1 // pred_fallthru
      _
    // Predicated region
    $region6: #{tpu_custom_call.1} parent=1 // pred_check
      _
    $region7: #{tpu_custom_call.1} parent=1 // pred_check_branch
      %19 = sbr.rel (0) target = $region9
    $region8: #{tpu_custom_call.1} parent=1 // pred_region
      _
    $region9: #{tpu_custom_call.1} parent=1 // pred_fallthru
      _
    // Predicated region
    $region10: #{tpu_custom_call.1} parent=1 // pred_check
      _
    $region11: #{tpu_custom_call.1} parent=1 // pred_check_branch
      %21 = sbr.rel (0) target = $region13
    $region12: #{tpu_custom_call.1} parent=1 // pred_region
      _
    $region13: #{tpu_custom_call.1} parent=1 // pred_fallthru
      _
    // Predicated region
    $region14: #{tpu_custom_call.1} parent=1 // pred_check
      _
    $region15: #{tpu_custom_call.1} parent=1 // pred_check_branch
      %23 = sbr.rel (0) target = $region17
    $region16: #{tpu_custom_call.1} parent=1 // pred_region
      _
    $region17: #{tpu_custom_call.1} parent=1 // pred_fallthru
      _
    // Predicated region
    $region18: #{tpu_custom_call.1} parent=1 // pred_check
      _
    $region19: #{tpu_custom_call.1} parent=1 // pred_check_branch
      %25 = sbr.rel (0) target = $region21
    $region20: #{tpu_custom_call.1} parent=1 // pred_region
      _
    $region21: #{tpu_custom_call.1} parent=1 // pred_fallthru
      _
    // Predicated region
    $region22: #{tpu_custom_call.1} parent=1 // pred_check
      _
    $region23: #{tpu_custom_call.1} parent=1 // pred_check_branch
      %27 = sbr.rel (0) target = $region25
    $region24: #{tpu_custom_call.1} parent=1 // pred_region
      _
    $region25: #{tpu_custom_call.1} parent=1 // pred_fallthru
      _
    // Predicated region
    $region26: #{tpu_custom_call.1} parent=1 // pred_check
      _
    $region27: #{tpu_custom_call.1} parent=1 // pred_check_branch
      %29 = sbr.rel (0) target = $region29
    $region28: #{tpu_custom_call.1} parent=1 // pred_region
      _
    $region29: #{tpu_custom_call.1} parent=1 // pred_fallthru
      _
    %p31 = scmp.eq.s32.totalorder 0, 0
    // Predicated region
    $region30: #{tpu_custom_call.1} parent=1 // pred_check
      %p32 = pneg %p31
    $region31: #{tpu_custom_call.1} parent=1 // pred_check_branch
      %34 = sbr.rel (%p32) target = $region33
    $region32: #{tpu_custom_call.1} parent=1 // pred_region
      %35 = vst [vmem:[#allocation2] sm:$0xff] 0.0
      %36 = vst [vmem:[#allocation2 + $0x8] sm:$0xff] 0.0
      %37 = vst [vmem:[#allocation2 + $0x10] sm:$0xff] 0.0
      %38 = vst [vmem:[#allocation2 + $0x18] sm:$0xff] 0.0
      %39 = vst [vmem:[#allocation2 + $0x20] sm:$0xff] 0.0
      %40 = vst [vmem:[#allocation2 + $0x28] sm:$0xff] 0.0
      %41 = vst [vmem:[#allocation2 + $0x30] sm:$0xff] 0.0
      %42 = vst [vmem:[#allocation2 + $0x38] sm:$0xff] 0.0
      %43 = vst [vmem:[#allocation2 + $0x40] sm:$0xff] 0.0
      %44 = vst [vmem:[#allocation2 + $0x48] sm:$0xff] 0.0
      %45 = vst [vmem:[#allocation2 + $0x50] sm:$0xff] 0.0
      %46 = vst [vmem:[#allocation2 + $0x58] sm:$0xff] 0.0
      %47 = vst [vmem:[#allocation2 + $0x60] sm:$0xff] 0.0
      %48 = vst [vmem:[#allocation2 + $0x68] sm:$0xff] 0.0
      %49 = vst [vmem:[#allocation2 + $0x70] sm:$0xff] 0.0
      %50 = vst [vmem:[#allocation2 + $0x78] sm:$0xff] 0.0
    $region33: #{tpu_custom_call.1} parent=1 // pred_fallthru
      _
    %v51 = vld [vmem:[#allocation2] sm:$0xff]
    %v52 = vld [vmem:[#allocation2 + $0x8] sm:$0xff]
    %v53 = vld [vmem:[#allocation2 + $0x10] sm:$0xff]
    %v54 = vld [vmem:[#allocation2 + $0x18] sm:$0xff]
    %v55 = vld [vmem:[#allocation2 + $0x20] sm:$0xff]
    %v56 = vld [vmem:[#allocation2 + $0x28] sm:$0xff]
    %v57 = vld [vmem:[#allocation2 + $0x30] sm:$0xff]
    %v58 = vld [vmem:[#allocation2 + $0x38] sm:$0xff]
    %v59 = vld [vmem:[#allocation2 + $0x40] sm:$0xff]
    %v60 = vld [vmem:[#allocation2 + $0x48] sm:$0xff]
    %v61 = vld [vmem:[#allocation2 + $0x50] sm:$0xff]
    %v62 = vld [vmem:[#allocation2 + $0x58] sm:$0xff]
    %v63 = vld [vmem:[#allocation2 + $0x60] sm:$0xff]
    %v64 = vld [vmem:[#allocation2 + $0x68] sm:$0xff]
    %v65 = vld [vmem:[#allocation2 + $0x70] sm:$0xff]
    %v66 = vld [vmem:[#allocation2 + $0x78] sm:$0xff]
    %v67 = vld [vmem:[%s0] sm:$0xff]
    %v68 = vld [vmem:[%s0 + $0x8] sm:$0xff]
    %v69 = vld [vmem:[%s0 + $0x10] sm:$0xff]
    %v70 = vld [vmem:[%s0 + $0x18] sm:$0xff]
    %v71 = vld [vmem:[%s0 + $0x20] sm:$0xff]
    %v72 = vld [vmem:[%s0 + $0x28] sm:$0xff]
    %v73 = vld [vmem:[%s0 + $0x30] sm:$0xff]
    %v74 = vld [vmem:[%s0 + $0x38] sm:$0xff]
    %v75 = vld [vmem:[%s0 + $0x40] sm:$0xff]
    %v76 = vld [vmem:[%s0 + $0x48] sm:$0xff]
    %v77 = vld [vmem:[%s0 + $0x50] sm:$0xff]
    %v78 = vld [vmem:[%s0 + $0x58] sm:$0xff]
    %v79 = vld [vmem:[%s0 + $0x60] sm:$0xff]
    %v80 = vld [vmem:[%s0 + $0x68] sm:$0xff]
    %v81 = vld [vmem:[%s0 + $0x70] sm:$0xff]
    %v82 = vld [vmem:[%s0 + $0x78] sm:$0xff]
    %v83 = vpack.c.bf16 %v68, %v67
    %v84 = vpack.c.bf16 %v70, %v69
    %v85 = vpack.c.bf16 %v72, %v71
    %v86 = vpack.c.bf16 %v74, %v73
    %v87 = vpack.c.bf16 %v76, %v75
    %v88 = vpack.c.bf16 %v78, %v77
    %v89 = vpack.c.bf16 %v80, %v79
    %v90 = vpack.c.bf16 %v82, %v81
    %v91 = vld [vmem:[%s1] sm:$0xf]
    %v92 = vld [vmem:[%s1 + $0x4] sm:$0xf]
    %v93 = vld [vmem:[%s1 + $0x8] sm:$0xf]
    %v94 = vld [vmem:[%s1 + $0xc] sm:$0xf]
    %v95 = vld [vmem:[%s1 + $0x10] sm:$0xf]
    %v96 = vld [vmem:[%s1 + $0x14] sm:$0xf]
    %v97 = vld [vmem:[%s1 + $0x18] sm:$0xf]
    %v98 = vld [vmem:[%s1 + $0x1c] sm:$0xf]
    %v107 = vunpack.c.l.b16 %v91
    %v108 = vunpack.c.l.b16 %v92
    %v109 = vunpack.c.l.b16 %v93
    %v110 = vunpack.c.l.b16 %v94
    %v111 = vunpack.c.l.b16 %v95
    %v112 = vunpack.c.l.b16 %v96
    %v113 = vunpack.c.l.b16 %v97
    %v114 = vunpack.c.l.b16 %v98
    %v115 = vpack.c.b16 %v108, %v107
    %v116 = vpack.c.b16 %v110, %v109
    %v117 = vpack.c.b16 %v112, %v111
    %v118 = vpack.c.b16 %v114, %v113
    %vm123 = vcmask 523264
    %v125 = vsel %vm123, %v83, 0
    %v128 = vsel %vm123, %v84, 0
    %v131 = vsel %vm123, %v85, 0
    %v134 = vsel %vm123, %v86, 0
    %v137 = vsel %vm123, %v87, 0
    %v140 = vsel %vm123, %v88, 0
    %v143 = vsel %vm123, %v89, 0
    %v146 = vsel %vm123, %v90, 0
    %148 = vmatprep.subr.bf16.mxu0 0
    %149 = vmatpush1.bf16.msra.mxu0 %v115
    %150 = vmatprep.subr.bf16.mxu0 0
    %151 = vmatpush1.bf16.msra.mxu0 %v116
    %152 = vmatprep.subr.bf16.mxu0 0
    %153 = vmatpush1.bf16.msra.mxu0 %v117
    %154 = vmatprep.subr.bf16.mxu0 0
    %155 = vmatpush1.bf16.msra.mxu0 %v118
    %156 = vmatprep.subr.bf16.mxu0 0
    %157 = vmatpush1.bf16.msra.mxu0 0
    %158 = vmatprep.subr.bf16.mxu0 0
    %159 = vmatpush1.bf16.msra.mxu0 0
    %160 = vmatprep.subr.bf16.mxu0 0
    %161 = vmatpush1.bf16.msra.mxu0 0
    %162 = vmatprep.subr.bf16.mxu0 0
    %163 = vmatpush1.bf16.msra.mxu0 0
    %164 = vmatprep.subr.bf16.mxu0 0
    %165 = vmatpush1.bf16.msra.mxu0 0
    %166 = vmatprep.subr.bf16.mxu0 0
    %167 = vmatpush1.bf16.msra.mxu0 0
    %168 = vmatprep.subr.bf16.mxu0 0
    %169 = vmatpush1.bf16.msra.mxu0 0
    %170 = vmatprep.subr.bf16.mxu0 0
    %171 = vmatpush1.bf16.msra.mxu0 0
    %172 = vmatprep.subr.bf16.mxu0 0
    %173 = vmatpush1.bf16.msra.mxu0 0
    %174 = vmatprep.subr.bf16.mxu0 0
    %175 = vmatpush1.bf16.msra.mxu0 0
    %176 = vmatprep.subr.bf16.mxu0 0
    %177 = vmatpush1.bf16.msra.mxu0 0
    %178 = vmatprep.subr.bf16.mxu0 0
    %179 = vmatpush1.bf16.msra.mxu0 0
    %180 = vmatprep.mubr.bf16.mxu0 0
    %181 = vmatmul.mubr.bf16.gmra.mrb[0].mxu0 %v125
    %v182 = vpop.f32.mrb[0].mxu0
    %v183 = vadd.f32 0.0, %v182
    %v184 = vpop.f32.mrb[0].mxu0
    %v185 = vpop.f32.mrb[0].mxu0
    %v186 = vadd.f32 0.0, %v185
    %v187 = vpop.f32.mrb[0].mxu0
    %188 = vmatprep.mubr.bf16.mxu0 0
    %189 = vmatmul.mubr.bf16.gmra.mrb[0].mxu0 %v128
    %v190 = vpop.f32.mrb[0].mxu0
    %v191 = vadd.f32 0.0, %v190
    %v192 = vpop.f32.mrb[0].mxu0
    %v193 = vpop.f32.mrb[0].mxu0
    %v194 = vadd.f32 0.0, %v193
    %v195 = vpop.f32.mrb[0].mxu0
    %196 = vmatprep.mubr.bf16.mxu0 0
    %197 = vmatmul.mubr.bf16.gmra.mrb[0].mxu0 %v131
    %v198 = vpop.f32.mrb[0].mxu0
    %v199 = vadd.f32 0.0, %v198
    %v200 = vpop.f32.mrb[0].mxu0
    %v201 = vpop.f32.mrb[0].mxu0
    %v202 = vadd.f32 0.0, %v201
    %v203 = vpop.f32.mrb[0].mxu0
    %204 = vmatprep.mubr.bf16.mxu0 0
    %205 = vmatmul.mubr.bf16.gmra.mrb[0].mxu0 %v134
    %v206 = vpop.f32.mrb[0].mxu0
    %v207 = vadd.f32 0.0, %v206
    %v208 = vpop.f32.mrb[0].mxu0
    %v209 = vpop.f32.mrb[0].mxu0
    %v210 = vadd.f32 0.0, %v209
    %v211 = vpop.f32.mrb[0].mxu0
    %212 = vmatprep.mubr.bf16.mxu0 0
    %213 = vmatmul.mubr.bf16.gmra.mrb[0].mxu0 %v137
    %v214 = vpop.f32.mrb[0].mxu0
    %v215 = vadd.f32 0.0, %v214
    %v216 = vpop.f32.mrb[0].mxu0
    %v217 = vpop.f32.mrb[0].mxu0
    %v218 = vadd.f32 0.0, %v217
    %v219 = vpop.f32.mrb[0].mxu0
    %220 = vmatprep.mubr.bf16.mxu0 0
    %221 = vmatmul.mubr.bf16.gmra.mrb[0].mxu0 %v140
    %v222 = vpop.f32.mrb[0].mxu0
    %v223 = vadd.f32 0.0, %v222
    %v224 = vpop.f32.mrb[0].mxu0
    %v225 = vpop.f32.mrb[0].mxu0
    %v226 = vadd.f32 0.0, %v225
    %v227 = vpop.f32.mrb[0].mxu0
    %228 = vmatprep.mubr.bf16.mxu0 0
    %229 = vmatmul.mubr.bf16.gmra.mrb[0].mxu0 %v143
    %v230 = vpop.f32.mrb[0].mxu0
    %v231 = vadd.f32 0.0, %v230
    %v232 = vpop.f32.mrb[0].mxu0
    %v233 = vpop.f32.mrb[0].mxu0
    %v234 = vadd.f32 0.0, %v233
    %v235 = vpop.f32.mrb[0].mxu0
    %236 = vmatprep.mubr.bf16.mxu0 0
    %237 = vmatmul.mubr.bf16.gmra.mrb[0].mxu0 %v146
    %v238 = vpop.f32.mrb[0].mxu0
    %v239 = vadd.f32 0.0, %v238
    %v240 = vpop.f32.mrb[0].mxu0
    %v241 = vpop.f32.mrb[0].mxu0
    %v242 = vadd.f32 0.0, %v241
    %v243 = vpop.f32.mrb[0].mxu0
    %244 = vdwg.mxu0
    %v245 = vadd.f32 %v51, %v183
    %v246 = vadd.f32 %v52, %v186
    %v247 = vadd.f32 %v53, %v191
    %v248 = vadd.f32 %v54, %v194
    %v249 = vadd.f32 %v55, %v199
    %v250 = vadd.f32 %v56, %v202
    %v251 = vadd.f32 %v57, %v207
    %v252 = vadd.f32 %v58, %v210
    %v253 = vadd.f32 %v59, %v215
    %v254 = vadd.f32 %v60, %v218
    %v255 = vadd.f32 %v61, %v223
    %v256 = vadd.f32 %v62, %v226
    %v257 = vadd.f32 %v63, %v231
    %v258 = vadd.f32 %v64, %v234
    %v259 = vadd.f32 %v65, %v239
    %v260 = vadd.f32 %v66, %v242
    %261 = vst [vmem:[#allocation2] sm:$0xff] %v245
    %262 = vst [vmem:[#allocation2 + $0x8] sm:$0xff] %v246
    %263 = vst [vmem:[#allocation2 + $0x10] sm:$0xff] %v247
    %264 = vst [vmem:[#allocation2 + $0x18] sm:$0xff] %v248
    %265 = vst [vmem:[#allocation2 + $0x20] sm:$0xff] %v249
    %266 = vst [vmem:[#allocation2 + $0x28] sm:$0xff] %v250
    %267 = vst [vmem:[#allocation2 + $0x30] sm:$0xff] %v251
    %268 = vst [vmem:[#allocation2 + $0x38] sm:$0xff] %v252
    %269 = vst [vmem:[#allocation2 + $0x40] sm:$0xff] %v253
    %270 = vst [vmem:[#allocation2 + $0x48] sm:$0xff] %v254
    %271 = vst [vmem:[#allocation2 + $0x50] sm:$0xff] %v255
    %272 = vst [vmem:[#allocation2 + $0x58] sm:$0xff] %v256
    %273 = vst [vmem:[#allocation2 + $0x60] sm:$0xff] %v257
    %274 = vst [vmem:[#allocation2 + $0x68] sm:$0xff] %v258
    %275 = vst [vmem:[#allocation2 + $0x70] sm:$0xff] %v259
    %276 = vst [vmem:[#allocation2 + $0x78] sm:$0xff] %v260
    // Predicated region
    $region34: #{tpu_custom_call.1} parent=1 // pred_check
      %p277 = pneg %p31
    $region35: #{tpu_custom_call.1} parent=1 // pred_check_branch
      %279 = sbr.rel (%p277) target = $region37
    $region36: #{tpu_custom_call.1} parent=1 // pred_region
      %v280 = vld [vmem:[#allocation2] sm:$0xff]
      %v281 = vld [vmem:[#allocation2 + $0x8] sm:$0xff]
      %v282 = vld [vmem:[#allocation2 + $0x10] sm:$0xff]
      %v283 = vld [vmem:[#allocation2 + $0x18] sm:$0xff]
      %v284 = vld [vmem:[#allocation2 + $0x20] sm:$0xff]
      %v285 = vld [vmem:[#allocation2 + $0x28] sm:$0xff]
      %v286 = vld [vmem:[#allocation2 + $0x30] sm:$0xff]
      %v287 = vld [vmem:[#allocation2 + $0x38] sm:$0xff]
      %v288 = vld [vmem:[#allocation2 + $0x40] sm:$0xff]
      %v289 = vld [vmem:[#allocation2 + $0x48] sm:$0xff]
      %v290 = vld [vmem:[#allocation2 + $0x50] sm:$0xff]
      %v291 = vld [vmem:[#allocation2 + $0x58] sm:$0xff]
      %v292 = vld [vmem:[#allocation2 + $0x60] sm:$0xff]
      %v293 = vld [vmem:[#allocation2 + $0x68] sm:$0xff]
      %v294 = vld [vmem:[#allocation2 + $0x70] sm:$0xff]
      %v295 = vld [vmem:[#allocation2 + $0x78] sm:$0xff]
      %v296 = vld [vmem:[%s2] sm:$0x1]
      %v298 = vlaneseq
      %v299 = vshrl.u32 %v298, 7
      %v300 = vsub.s32 0, %v299
      %v301 = vrot.slane %v296, %v300
      %v303 = vadd.f32 %v280, %v301
      %v304 = vadd.f32 %v281, %v301
      %v305 = vadd.f32 %v282, %v301
      %v306 = vadd.f32 %v283, %v301
      %v307 = vadd.f32 %v284, %v301
      %v308 = vadd.f32 %v285, %v301
      %v309 = vadd.f32 %v286, %v301
      %v310 = vadd.f32 %v287, %v301
      %v311 = vadd.f32 %v288, %v301
      %v312 = vadd.f32 %v289, %v301
      %v313 = vadd.f32 %v290, %v301
      %v314 = vadd.f32 %v291, %v301
      %v315 = vadd.f32 %v292, %v301
      %v316 = vadd.f32 %v293, %v301
      %v317 = vadd.f32 %v294, %v301
      %v318 = vadd.f32 %v295, %v301
      %v319 = vmax.f32 %v303, 0.0
      %v320 = vmax.f32 %v304, 0.0
      %v321 = vmax.f32 %v305, 0.0
      %v322 = vmax.f32 %v306, 0.0
      %v323 = vmax.f32 %v307, 0.0
      %v324 = vmax.f32 %v308, 0.0
      %v325 = vmax.f32 %v309, 0.0
      %v326 = vmax.f32 %v310, 0.0
      %v327 = vmax.f32 %v311, 0.0
      %v328 = vmax.f32 %v312, 0.0
      %v329 = vmax.f32 %v313, 0.0
      %v330 = vmax.f32 %v314, 0.0
      %v331 = vmax.f32 %v315, 0.0
      %v332 = vmax.f32 %v316, 0.0
      %v333 = vmax.f32 %v317, 0.0
      %v334 = vmax.f32 %v318, 0.0
      %v335 = vpack.c.bf16 %v320, %v319
      %v336 = vpack.c.bf16 %v322, %v321
      %v337 = vpack.c.bf16 %v324, %v323
      %v338 = vpack.c.bf16 %v326, %v325
      %v339 = vpack.c.bf16 %v328, %v327
      %v340 = vpack.c.bf16 %v330, %v329
      %v341 = vpack.c.bf16 %v332, %v331
      %v342 = vpack.c.bf16 %v334, %v333
      %v351 = vunpack.c.l.b16 %v335
      %v352 = vunpack.c.h.b16 %v335
      %v353 = vunpack.c.l.b16 %v336
      %v354 = vunpack.c.h.b16 %v336
      %v355 = vunpack.c.l.b16 %v337
      %v356 = vunpack.c.h.b16 %v337
      %v357 = vunpack.c.l.b16 %v338
      %v358 = vunpack.c.h.b16 %v338
      %v359 = vunpack.c.l.b16 %v339
      %v360 = vunpack.c.h.b16 %v339
      %v361 = vunpack.c.l.b16 %v340
      %v362 = vunpack.c.h.b16 %v340
      %v363 = vunpack.c.l.b16 %v341
      %v364 = vunpack.c.h.b16 %v341
      %v365 = vunpack.c.l.b16 %v342
      %v366 = vunpack.c.h.b16 %v342
      %v367 = vpack.c.b16 %v351, %v351
      %v368 = vpack.c.b16 %v352, %v352
      %v369 = vpack.c.b16 %v353, %v353
      %v370 = vpack.c.b16 %v354, %v354
      %v371 = vpack.c.b16 %v355, %v355
      %v372 = vpack.c.b16 %v356, %v356
      %v373 = vpack.c.b16 %v357, %v357
      %v374 = vpack.c.b16 %v358, %v358
      %v375 = vpack.c.b16 %v359, %v359
      %v376 = vpack.c.b16 %v360, %v360
      %v377 = vpack.c.b16 %v361, %v361
      %v378 = vpack.c.b16 %v362, %v362
      %v379 = vpack.c.b16 %v363, %v363
      %v380 = vpack.c.b16 %v364, %v364
      %v381 = vpack.c.b16 %v365, %v365
      %v382 = vpack.c.b16 %v366, %v366
      %399 = vst [vmem:[#allocation3] sm:$0xf] %v367
      %400 = vst [vmem:[#allocation3 + $0x4] sm:$0xf] %v368
      %401 = vst [vmem:[#allocation3 + $0x8] sm:$0xf] %v369
      %402 = vst [vmem:[#allocation3 + $0xc] sm:$0xf] %v370
      %403 = vst [vmem:[#allocation3 + $0x10] sm:$0xf] %v371
      %404 = vst [vmem:[#allocation3 + $0x14] sm:$0xf] %v372
      %405 = vst [vmem:[#allocation3 + $0x18] sm:$0xf] %v373
      %406 = vst [vmem:[#allocation3 + $0x1c] sm:$0xf] %v374
      %407 = vst [vmem:[#allocation3 + $0x20] sm:$0xf] %v375
      %408 = vst [vmem:[#allocation3 + $0x24] sm:$0xf] %v376
      %409 = vst [vmem:[#allocation3 + $0x28] sm:$0xf] %v377
      %410 = vst [vmem:[#allocation3 + $0x2c] sm:$0xf] %v378
      %411 = vst [vmem:[#allocation3 + $0x30] sm:$0xf] %v379
      %412 = vst [vmem:[#allocation3 + $0x34] sm:$0xf] %v380
      %413 = vst [vmem:[#allocation3 + $0x38] sm:$0xf] %v381
      %414 = vst [vmem:[#allocation3 + $0x3c] sm:$0xf] %v382
      %v415 = vld [vmem:[%s3] sm:$0xf]
      %v416 = vld [vmem:[%s3 + $0x4] sm:$0xf]
      %v417 = vld [vmem:[%s3 + $0x8] sm:$0xf]
      %v418 = vld [vmem:[%s3 + $0xc] sm:$0xf]
      %v419 = vld [vmem:[%s3 + $0x10] sm:$0xf]
      %v420 = vld [vmem:[%s3 + $0x14] sm:$0xf]
      %v421 = vld [vmem:[%s3 + $0x18] sm:$0xf]
      %v422 = vld [vmem:[%s3 + $0x1c] sm:$0xf]
      %v423 = vld [vmem:[%s3 + $0x20] sm:$0xf]
      %v424 = vld [vmem:[%s3 + $0x24] sm:$0xf]
      %v425 = vld [vmem:[%s3 + $0x28] sm:$0xf]
      %v426 = vld [vmem:[%s3 + $0x2c] sm:$0xf]
      %v427 = vld [vmem:[%s3 + $0x30] sm:$0xf]
      %v428 = vld [vmem:[%s3 + $0x34] sm:$0xf]
      %v429 = vld [vmem:[%s3 + $0x38] sm:$0xf]
      %v430 = vld [vmem:[%s3 + $0x3c] sm:$0xf]
      %v431 = vld [vmem:[%s4] sm:$0x1]
      %v433 = vlaneseq
      %v434 = vshrl.u32 %v433, 7
      %v435 = vsub.s32 0, %v434
      %v436 = vrot.slane %v431, %v435
      %v454 = vunpack.c.l.b16 %v415
      %v455 = vunpack.c.l.b16 %v416
      %v456 = vunpack.c.l.b16 %v417
      %v457 = vunpack.c.l.b16 %v418
      %v458 = vunpack.c.l.b16 %v419
      %v459 = vunpack.c.l.b16 %v420
      %v460 = vunpack.c.l.b16 %v421
      %v461 = vunpack.c.l.b16 %v422
      %v462 = vunpack.c.l.b16 %v423
      %v463 = vunpack.c.l.b16 %v424
      %v464 = vunpack.c.l.b16 %v425
      %v465 = vunpack.c.l.b16 %v426
      %v466 = vunpack.c.l.b16 %v427
      %v467 = vunpack.c.l.b16 %v428
      %v468 = vunpack.c.l.b16 %v429
      %v469 = vunpack.c.l.b16 %v430
      %v470 = vpack.c.b16 %v455, %v454
      %v471 = vpack.c.b16 %v457, %v456
      %v472 = vpack.c.b16 %v459, %v458
      %v473 = vpack.c.b16 %v461, %v460
      %v474 = vpack.c.b16 %v463, %v462
      %v475 = vpack.c.b16 %v465, %v464
      %v476 = vpack.c.b16 %v467, %v466
      %v477 = vpack.c.b16 %v469, %v468
      %486 = vmatprep.subr.bf16.mxu0 0
      %487 = vmatpush1.bf16.msra.mxu0 %v470
      %488 = vmatprep.subr.bf16.mxu0 0
      %489 = vmatpush1.bf16.msra.mxu0 %v471
      %490 = vmatprep.subr.bf16.mxu0 0
      %491 = vmatpush1.bf16.msra.mxu0 %v472
      %492 = vmatprep.subr.bf16.mxu0 0
      %493 = vmatpush1.bf16.msra.mxu0 %v473
      %494 = vmatprep.subr.bf16.mxu0 0
      %495 = vmatpush1.bf16.msra.mxu0 %v474
      %496 = vmatprep.subr.bf16.mxu0 0
      %497 = vmatpush1.bf16.msra.mxu0 %v475
      %498 = vmatprep.subr.bf16.mxu0 0
      %499 = vmatpush1.bf16.msra.mxu0 %v476
      %500 = vmatprep.subr.bf16.mxu0 0
      %501 = vmatpush1.bf16.msra.mxu0 %v477
      %502 = vmatprep.subr.bf16.mxu0 0
      %503 = vmatpush1.bf16.msra.mxu0 0
      %504 = vmatprep.subr.bf16.mxu0 0
      %505 = vmatpush1.bf16.msra.mxu0 0
      %506 = vmatprep.subr.bf16.mxu0 0
      %507 = vmatpush1.bf16.msra.mxu0 0
      %508 = vmatprep.subr.bf16.mxu0 0
      %509 = vmatpush1.bf16.msra.mxu0 0
      %510 = vmatprep.subr.bf16.mxu0 0
      %511 = vmatpush1.bf16.msra.mxu0 0
      %512 = vmatprep.subr.bf16.mxu0 0
      %513 = vmatpush1.bf16.msra.mxu0 0
      %514 = vmatprep.subr.bf16.mxu0 0
      %515 = vmatpush1.bf16.msra.mxu0 0
      %516 = vmatprep.subr.bf16.mxu0 0
      %517 = vmatpush1.bf16.msra.mxu0 0
      %518 = vmatprep.mubr.bf16.mxu0 0
      %519 = vmatmul.mubr.bf16.gmra.mrb[0].mxu0 %v335
      %v520 = vpop.f32.mrb[0].mxu0
      %v521 = vadd.f32 %v436, %v520
      %v522 = vpop.f32.mrb[0].mxu0
      %v523 = vpop.f32.mrb[0].mxu0
      %v524 = vadd.f32 %v436, %v523
      %v525 = vpop.f32.mrb[0].mxu0
      %526 = vmatprep.mubr.bf16.mxu0 0
      %527 = vmatmul.mubr.bf16.gmra.mrb[0].mxu0 %v336
      %v528 = vpop.f32.mrb[0].mxu0
      %v529 = vadd.f32 %v436, %v528
      %v530 = vpop.f32.mrb[0].mxu0
      %v531 = vpop.f32.mrb[0].mxu0
      %v532 = vadd.f32 %v436, %v531
      %v533 = vpop.f32.mrb[0].mxu0
      %534 = vmatprep.mubr.bf16.mxu0 0
      %535 = vmatmul.mubr.bf16.gmra.mrb[0].mxu0 %v337
      %v536 = vpop.f32.mrb[0].mxu0
      %v537 = vadd.f32 %v436, %v536
      %v538 = vpop.f32.mrb[0].mxu0
      %v539 = vpop.f32.mrb[0].mxu0
      %v540 = vadd.f32 %v436, %v539
      %v541 = vpop.f32.mrb[0].mxu0
      %542 = vmatprep.mubr.bf16.mxu0 0
      %543 = vmatmul.mubr.bf16.gmra.mrb[0].mxu0 %v338
      %v544 = vpop.f32.mrb[0].mxu0
      %v545 = vadd.f32 %v436, %v544
      %v546 = vpop.f32.mrb[0].mxu0
      %v547 = vpop.f32.mrb[0].mxu0
      %v548 = vadd.f32 %v436, %v547
      %v549 = vpop.f32.mrb[0].mxu0
      %550 = vmatprep.mubr.bf16.mxu0 0
      %551 = vmatmul.mubr.bf16.gmra.mrb[0].mxu0 %v339
      %v552 = vpop.f32.mrb[0].mxu0
      %v553 = vadd.f32 %v436, %v552
      %v554 = vpop.f32.mrb[0].mxu0
      %v555 = vpop.f32.mrb[0].mxu0
      %v556 = vadd.f32 %v436, %v555
      %v557 = vpop.f32.mrb[0].mxu0
      %558 = vmatprep.mubr.bf16.mxu0 0
      %559 = vmatmul.mubr.bf16.gmra.mrb[0].mxu0 %v340
      %v560 = vpop.f32.mrb[0].mxu0
      %v561 = vadd.f32 %v436, %v560
      %v562 = vpop.f32.mrb[0].mxu0
      %v563 = vpop.f32.mrb[0].mxu0
      %v564 = vadd.f32 %v436, %v563
      %v565 = vpop.f32.mrb[0].mxu0
      %566 = vmatprep.mubr.bf16.mxu0 0
      %567 = vmatmul.mubr.bf16.gmra.mrb[0].mxu0 %v341
      %v568 = vpop.f32.mrb[0].mxu0
      %v569 = vadd.f32 %v436, %v568
      %v570 = vpop.f32.mrb[0].mxu0
      %v571 = vpop.f32.mrb[0].mxu0
      %v572 = vadd.f32 %v436, %v571
      %v573 = vpop.f32.mrb[0].mxu0
      %574 = vmatprep.mubr.bf16.mxu0 0
      %575 = vmatmul.mubr.bf16.gmra.mrb[0].mxu0 %v342
      %v576 = vpop.f32.mrb[0].mxu0
      %v577 = vadd.f32 %v436, %v576
      %v578 = vpop.f32.mrb[0].mxu0
      %v579 = vpop.f32.mrb[0].mxu0
      %v580 = vadd.f32 %v436, %v579
      %v581 = vpop.f32.mrb[0].mxu0
      %582 = vdwg.mxu0
      %v583 = vmax.f32 %v521, 0.0
      %v584 = vmax.f32 %v524, 0.0
      %v585 = vmax.f32 %v529, 0.0
      %v586 = vmax.f32 %v532, 0.0
      %v587 = vmax.f32 %v537, 0.0
      %v588 = vmax.f32 %v540, 0.0
      %v589 = vmax.f32 %v545, 0.0
      %v590 = vmax.f32 %v548, 0.0
      %v591 = vmax.f32 %v553, 0.0
      %v592 = vmax.f32 %v556, 0.0
      %v593 = vmax.f32 %v561, 0.0
      %v594 = vmax.f32 %v564, 0.0
      %v595 = vmax.f32 %v569, 0.0
      %v596 = vmax.f32 %v572, 0.0
      %v597 = vmax.f32 %v577, 0.0
      %v598 = vmax.f32 %v580, 0.0
      %v599 = vpack.c.bf16 %v584, %v583
      %v600 = vpack.c.bf16 %v586, %v585
      %v601 = vpack.c.bf16 %v588, %v587
      %v602 = vpack.c.bf16 %v590, %v589
      %v603 = vpack.c.bf16 %v592, %v591
      %v604 = vpack.c.bf16 %v594, %v593
      %v605 = vpack.c.bf16 %v596, %v595
      %v606 = vpack.c.bf16 %v598, %v597
      %v607 = vld [vmem:[%s5] sm:$0xf]
      %v608 = vld [vmem:[%s5 + $0x4] sm:$0xf]
      %v609 = vld [vmem:[%s5 + $0x8] sm:$0xf]
      %v610 = vld [vmem:[%s5 + $0xc] sm:$0xf]
      %v611 = vld [vmem:[%s5 + $0x10] sm:$0xf]
      %v612 = vld [vmem:[%s5 + $0x14] sm:$0xf]
      %v613 = vld [vmem:[%s5 + $0x18] sm:$0xf]
      %v614 = vld [vmem:[%s5 + $0x1c] sm:$0xf]
      %v615 = vld [vmem:[%s5 + $0x20] sm:$0xf]
      %v616 = vld [vmem:[%s5 + $0x24] sm:$0xf]
      %v617 = vld [vmem:[%s5 + $0x28] sm:$0xf]
      %v618 = vld [vmem:[%s5 + $0x2c] sm:$0xf]
      %v619 = vld [vmem:[%s5 + $0x30] sm:$0xf]
      %v620 = vld [vmem:[%s5 + $0x34] sm:$0xf]
      %v621 = vld [vmem:[%s5 + $0x38] sm:$0xf]
      %v622 = vld [vmem:[%s5 + $0x3c] sm:$0xf]
      %v623 = vld [vmem:[%s6] sm:$0x1]
      %v625 = vlaneseq
      %v626 = vshrl.u32 %v625, 7
      %v627 = vsub.s32 0, %v626
      %v628 = vrot.slane %v623, %v627
      %v646 = vunpack.c.l.b16 %v607
      %v647 = vunpack.c.l.b16 %v608
      %v648 = vunpack.c.l.b16 %v609
      %v649 = vunpack.c.l.b16 %v610
      %v650 = vunpack.c.l.b16 %v611
      %v651 = vunpack.c.l.b16 %v612
      %v652 = vunpack.c.l.b16 %v613
      %v653 = vunpack.c.l.b16 %v614
      %v654 = vunpack.c.l.b16 %v615
      %v655 = vunpack.c.l.b16 %v616
      %v656 = vunpack.c.l.b16 %v617
      %v657 = vunpack.c.l.b16 %v618
      %v658 = vunpack.c.l.b16 %v619
      %v659 = vunpack.c.l.b16 %v620
      %v660 = vunpack.c.l.b16 %v621
      %v661 = vunpack.c.l.b16 %v622
      %v662 = vpack.c.b16 %v647, %v646
      %v663 = vpack.c.b16 %v649, %v648
      %v664 = vpack.c.b16 %v651, %v650
      %v665 = vpack.c.b16 %v653, %v652
      %v666 = vpack.c.b16 %v655, %v654
      %v667 = vpack.c.b16 %v657, %v656
      %v668 = vpack.c.b16 %v659, %v658
      %v669 = vpack.c.b16 %v661, %v660
      %678 = vmatprep.subr.bf16.mxu0 0
      %679 = vmatpush1.bf16.msra.mxu0 %v662
      %680 = vmatprep.subr.bf16.mxu0 0
      %681 = vmatpush1.bf16.msra.mxu0 %v663
      %682 = vmatprep.subr.bf16.mxu0 0
      %683 = vmatpush1.bf16.msra.mxu0 %v664
      %684 = vmatprep.subr.bf16.mxu0 0
      %685 = vmatpush1.bf16.msra.mxu0 %v665
      %686 = vmatprep.subr.bf16.mxu0 0
      %687 = vmatpush1.bf16.msra.mxu0 %v666
      %688 = vmatprep.subr.bf16.mxu0 0
      %689 = vmatpush1.bf16.msra.mxu0 %v667
      %690 = vmatprep.subr.bf16.mxu0 0
      %691 = vmatpush1.bf16.msra.mxu0 %v668
      %692 = vmatprep.subr.bf16.mxu0 0
      %693 = vmatpush1.bf16.msra.mxu0 %v669
      %694 = vmatprep.subr.bf16.mxu0 0
      %695 = vmatpush1.bf16.msra.mxu0 0
      %696 = vmatprep.subr.bf16.mxu0 0
      %697 = vmatpush1.bf16.msra.mxu0 0
      %698 = vmatprep.subr.bf16.mxu0 0
      %699 = vmatpush1.bf16.msra.mxu0 0
      %700 = vmatprep.subr.bf16.mxu0 0
      %701 = vmatpush1.bf16.msra.mxu0 0
      %702 = vmatprep.subr.bf16.mxu0 0
      %703 = vmatpush1.bf16.msra.mxu0 0
      %704 = vmatprep.subr.bf16.mxu0 0
      %705 = vmatpush1.bf16.msra.mxu0 0
      %706 = vmatprep.subr.bf16.mxu0 0
      %707 = vmatpush1.bf16.msra.mxu0 0
      %708 = vmatprep.subr.bf16.mxu0 0
      %709 = vmatpush1.bf16.msra.mxu0 0
      %710 = vmatprep.mubr.bf16.mxu0 0
      %711 = vmatmul.mubr.bf16.gmra.mrb[0].mxu0 %v599
      %v712 = vpop.f32.mrb[0].mxu0
      %v713 = vadd.f32 %v628, %v712
      %v714 = vpop.f32.mrb[0].mxu0
      %v715 = vpop.f32.mrb[0].mxu0
      %v716 = vadd.f32 %v628, %v715
      %v717 = vpop.f32.mrb[0].mxu0
      %718 = vmatprep.mubr.bf16.mxu0 0
      %719 = vmatmul.mubr.bf16.gmra.mrb[0].mxu0 %v600
      %v720 = vpop.f32.mrb[0].mxu0
      %v721 = vadd.f32 %v628, %v720
      %v722 = vpop.f32.mrb[0].mxu0
      %v723 = vpop.f32.mrb[0].mxu0
      %v724 = vadd.f32 %v628, %v723
      %v725 = vpop.f32.mrb[0].mxu0
      %726 = vmatprep.mubr.bf16.mxu0 0
      %727 = vmatmul.mubr.bf16.gmra.mrb[0].mxu0 %v601
      %v728 = vpop.f32.mrb[0].mxu0
      %v729 = vadd.f32 %v628, %v728
      %v730 = vpop.f32.mrb[0].mxu0
      %v731 = vpop.f32.mrb[0].mxu0
      %v732 = vadd.f32 %v628, %v731
      %v733 = vpop.f32.mrb[0].mxu0
      %734 = vmatprep.mubr.bf16.mxu0 0
      %735 = vmatmul.mubr.bf16.gmra.mrb[0].mxu0 %v602
      %v736 = vpop.f32.mrb[0].mxu0
      %v737 = vadd.f32 %v628, %v736
      %v738 = vpop.f32.mrb[0].mxu0
      %v739 = vpop.f32.mrb[0].mxu0
      %v740 = vadd.f32 %v628, %v739
      %v741 = vpop.f32.mrb[0].mxu0
      %742 = vmatprep.mubr.bf16.mxu0 0
      %743 = vmatmul.mubr.bf16.gmra.mrb[0].mxu0 %v603
      %v744 = vpop.f32.mrb[0].mxu0
      %v745 = vadd.f32 %v628, %v744
      %v746 = vpop.f32.mrb[0].mxu0
      %v747 = vpop.f32.mrb[0].mxu0
      %v748 = vadd.f32 %v628, %v747
      %v749 = vpop.f32.mrb[0].mxu0
      %750 = vmatprep.mubr.bf16.mxu0 0
      %751 = vmatmul.mubr.bf16.gmra.mrb[0].mxu0 %v604
      %v752 = vpop.f32.mrb[0].mxu0
      %v753 = vadd.f32 %v628, %v752
      %v754 = vpop.f32.mrb[0].mxu0
      %v755 = vpop.f32.mrb[0].mxu0
      %v756 = vadd.f32 %v628, %v755
      %v757 = vpop.f32.mrb[0].mxu0
      %758 = vmatprep.mubr.bf16.mxu0 0
      %759 = vmatmul.mubr.bf16.gmra.mrb[0].mxu0 %v605
      %v760 = vpop.f32.mrb[0].mxu0
      %v761 = vadd.f32 %v628, %v760
      %v762 = vpop.f32.mrb[0].mxu0
      %v763 = vpop.f32.mrb[0].mxu0
      %v764 = vadd.f32 %v628, %v763
      %v765 = vpop.f32.mrb[0].mxu0
      %766 = vmatprep.mubr.bf16.mxu0 0
      %767 = vmatmul.mubr.bf16.gmra.mrb[0].mxu0 %v606
      %v768 = vpop.f32.mrb[0].mxu0
      %v769 = vadd.f32 %v628, %v768
      %v770 = vpop.f32.mrb[0].mxu0
      %v771 = vpop.f32.mrb[0].mxu0
      %v772 = vadd.f32 %v628, %v771
      %v773 = vpop.f32.mrb[0].mxu0
      %774 = vdwg.mxu0
      %v775 = vmul.f32 %v713, %v713
      %v776 = vmul.f32 %v716, %v716
      %v777 = vmul.f32 %v721, %v721
      %v778 = vmul.f32 %v724, %v724
      %v779 = vmul.f32 %v729, %v729
      %v780 = vmul.f32 %v732, %v732
      %v781 = vmul.f32 %v737, %v737
      %v782 = vmul.f32 %v740, %v740
      %v783 = vmul.f32 %v745, %v745
      %v784 = vmul.f32 %v748, %v748
      %v785 = vmul.f32 %v753, %v753
      %v786 = vmul.f32 %v756, %v756
      %v787 = vmul.f32 %v761, %v761
      %v788 = vmul.f32 %v764, %v764
      %v789 = vmul.f32 %v769, %v769
      %v790 = vmul.f32 %v772, %v772
      %791 = vadd.xlane.f32.xlu0 %v775
      %v792 = vpop.xlane.xlu0 %791
      %793 = vadd.xlane.f32.xlu0 %v776
      %v794 = vpop.xlane.xlu0 %793
      %795 = vadd.xlane.f32.xlu0 %v777
      %v796 = vpop.xlane.xlu0 %795
      %797 = vadd.xlane.f32.xlu0 %v778
      %v798 = vpop.xlane.xlu0 %797
      %799 = vadd.xlane.f32.xlu0 %v779
      %v800 = vpop.xlane.xlu0 %799
      %801 = vadd.xlane.f32.xlu0 %v780
      %v802 = vpop.xlane.xlu0 %801
      %803 = vadd.xlane.f32.xlu0 %v781
      %v804 = vpop.xlane.xlu0 %803
      %805 = vadd.xlane.f32.xlu0 %v782
      %v806 = vpop.xlane.xlu0 %805
      %807 = vadd.xlane.f32.xlu0 %v783
      %v808 = vpop.xlane.xlu0 %807
      %809 = vadd.xlane.f32.xlu0 %v784
      %v810 = vpop.xlane.xlu0 %809
      %811 = vadd.xlane.f32.xlu0 %v785
      %v812 = vpop.xlane.xlu0 %811
      %813 = vadd.xlane.f32.xlu0 %v786
      %v814 = vpop.xlane.xlu0 %813
      %815 = vadd.xlane.f32.xlu0 %v787
      %v816 = vpop.xlane.xlu0 %815
      %817 = vadd.xlane.f32.xlu0 %v788
      %v818 = vpop.xlane.xlu0 %817
      %819 = vadd.xlane.f32.xlu0 %v789
      %v820 = vpop.xlane.xlu0 %819
      %821 = vadd.xlane.f32.xlu0 %v790
      %v822 = vpop.xlane.xlu0 %821
      %v823 = vmax.f32 %v792, 1e-24
      %v824 = vmax.f32 %v794, 1e-24
      %v825 = vmax.f32 %v796, 1e-24
      %v826 = vmax.f32 %v798, 1e-24
      %v827 = vmax.f32 %v800, 1e-24
      %v828 = vmax.f32 %v802, 1e-24
      %v829 = vmax.f32 %v804, 1e-24
      %v830 = vmax.f32 %v806, 1e-24
      %v831 = vmax.f32 %v808, 1e-24
      %v832 = vmax.f32 %v810, 1e-24
      %v833 = vmax.f32 %v812, 1e-24
      %v834 = vmax.f32 %v814, 1e-24
      %v835 = vmax.f32 %v816, 1e-24
      %v836 = vmax.f32 %v818, 1e-24
      %v837 = vmax.f32 %v820, 1e-24
      %v838 = vmax.f32 %v822, 1e-24
      %v839 = vrsqrt.pop %v823
      %v840 = vrsqrt.pop %v824
      %v841 = vrsqrt.pop %v825
      %v842 = vrsqrt.pop %v826
      %v843 = vrsqrt.pop %v827
      %v844 = vrsqrt.pop %v828
      %v845 = vrsqrt.pop %v829
      %v846 = vrsqrt.pop %v830
      %v847 = vrsqrt.pop %v831
      %v848 = vrsqrt.pop %v832
      %v849 = vrsqrt.pop %v833
      %v850 = vrsqrt.pop %v834
      %v851 = vrsqrt.pop %v835
      %v852 = vrsqrt.pop %v836
      %v853 = vrsqrt.pop %v837
      %v854 = vrsqrt.pop %v838
      %v855 = vmul.f32 %v713, %v839
      %v856 = vmul.f32 %v716, %v840
      %v857 = vmul.f32 %v721, %v841
      %v858 = vmul.f32 %v724, %v842
      %v859 = vmul.f32 %v729, %v843
      %v860 = vmul.f32 %v732, %v844
      %v861 = vmul.f32 %v737, %v845
      %v862 = vmul.f32 %v740, %v846
      %v863 = vmul.f32 %v745, %v847
      %v864 = vmul.f32 %v748, %v848
      %v865 = vmul.f32 %v753, %v849
      %v866 = vmul.f32 %v756, %v850
      %v867 = vmul.f32 %v761, %v851
      %v868 = vmul.f32 %v764, %v852
      %v869 = vmul.f32 %v769, %v853
      %v870 = vmul.f32 %v772, %v854
      %v871 = vpack.c.bf16 %v856, %v855
      %v872 = vpack.c.bf16 %v858, %v857
      %v873 = vpack.c.bf16 %v860, %v859
      %v874 = vpack.c.bf16 %v862, %v861
      %v875 = vpack.c.bf16 %v864, %v863
      %v876 = vpack.c.bf16 %v866, %v865
      %v877 = vpack.c.bf16 %v868, %v867
      %v878 = vpack.c.bf16 %v870, %v869
      %v887 = vunpack.c.l.b16 %v871
      %v888 = vunpack.c.h.b16 %v871
      %v889 = vunpack.c.l.b16 %v872
      %v890 = vunpack.c.h.b16 %v872
      %v891 = vunpack.c.l.b16 %v873
      %v892 = vunpack.c.h.b16 %v873
      %v893 = vunpack.c.l.b16 %v874
      %v894 = vunpack.c.h.b16 %v874
      %v895 = vunpack.c.l.b16 %v875
      %v896 = vunpack.c.h.b16 %v875
      %v897 = vunpack.c.l.b16 %v876
      %v898 = vunpack.c.h.b16 %v876
      %v899 = vunpack.c.l.b16 %v877
      %v900 = vunpack.c.h.b16 %v877
      %v901 = vunpack.c.l.b16 %v878
      %v902 = vunpack.c.h.b16 %v878
      %v903 = vpack.c.b16 %v887, %v887
      %v904 = vpack.c.b16 %v888, %v888
      %v905 = vpack.c.b16 %v889, %v889
      %v906 = vpack.c.b16 %v890, %v890
      %v907 = vpack.c.b16 %v891, %v891
      %v908 = vpack.c.b16 %v892, %v892
      %v909 = vpack.c.b16 %v893, %v893
      %v910 = vpack.c.b16 %v894, %v894
      %v911 = vpack.c.b16 %v895, %v895
      %v912 = vpack.c.b16 %v896, %v896
      %v913 = vpack.c.b16 %v897, %v897
      %v914 = vpack.c.b16 %v898, %v898
      %v915 = vpack.c.b16 %v899, %v899
      %v916 = vpack.c.b16 %v900, %v900
      %v917 = vpack.c.b16 %v901, %v901
      %v918 = vpack.c.b16 %v902, %v902
      %935 = vst [vmem:[#allocation5] sm:$0xf] %v903
      %936 = vst [vmem:[#allocation5 + $0x4] sm:$0xf] %v904
      %937 = vst [vmem:[#allocation5 + $0x8] sm:$0xf] %v905
      %938 = vst [vmem:[#allocation5 + $0xc] sm:$0xf] %v906
      %939 = vst [vmem:[#allocation5 + $0x10] sm:$0xf] %v907
      %940 = vst [vmem:[#allocation5 + $0x14] sm:$0xf] %v908
      %941 = vst [vmem:[#allocation5 + $0x18] sm:$0xf] %v909
      %942 = vst [vmem:[#allocation5 + $0x1c] sm:$0xf] %v910
      %943 = vst [vmem:[#allocation5 + $0x20] sm:$0xf] %v911
      %944 = vst [vmem:[#allocation5 + $0x24] sm:$0xf] %v912
      %945 = vst [vmem:[#allocation5 + $0x28] sm:$0xf] %v913
      %946 = vst [vmem:[#allocation5 + $0x2c] sm:$0xf] %v914
      %947 = vst [vmem:[#allocation5 + $0x30] sm:$0xf] %v915
      %948 = vst [vmem:[#allocation5 + $0x34] sm:$0xf] %v916
      %949 = vst [vmem:[#allocation5 + $0x38] sm:$0xf] %v917
      %950 = vst [vmem:[#allocation5 + $0x3c] sm:$0xf] %v918
    $region37: #{tpu_custom_call.1} parent=1 // pred_fallthru
      _
    // Predicated region
    $region38: #{tpu_custom_call.1} parent=1 // pred_check
      _
    $region39: #{tpu_custom_call.1} parent=1 // pred_check_branch
      %952 = sbr.rel (0) target = $region41
    $region40: #{tpu_custom_call.1} parent=1 // pred_region
      %s954 = ssub.s32 1024, 1024
      %955 = vsyncadd [#allocation4], %s954
      %s956 = sshll.u32 [#allocation3], 4
      %s957 = int_to_ptr.vmem [resolvable:$true] %s956
      %962 = dma.vmem_to_hbm [thread:$0]  %s957, 1024, %s7, [#allocation4], 64, 64, 4
    $region41: #{tpu_custom_call.1} parent=1 // pred_fallthru
      _
    // Predicated region
    $region42: #{tpu_custom_call.1} parent=1 // pred_check
      _
    $region43: #{tpu_custom_call.1} parent=1 // pred_check_branch
      %964 = sbr.rel (0) target = $region45
    $region44: #{tpu_custom_call.1} parent=1 // pred_region
      %s966 = ssub.s32 1024, 1024
      %967 = vsyncadd [#allocation6], %s966
      %s968 = sshll.u32 [#allocation5], 4
      %s969 = int_to_ptr.vmem [resolvable:$true] %s968
      %974 = dma.vmem_to_hbm [thread:$0]  %s969, 1024, %s8, [#allocation6], 64, 64, 4
    $region45: #{tpu_custom_call.1} parent=1 // pred_fallthru
      _
    // Predicated region
    $region46: #{tpu_custom_call.1} parent=1 // pred_check
      _
    $region47: #{tpu_custom_call.1} parent=1 // pred_check_branch
      %976 = sbr.rel (0) target = $region49
    $region48: #{tpu_custom_call.1} parent=1 // pred_region
      %977 = dma.done [#allocation4], 1024
    $region49: #{tpu_custom_call.1} parent=1 // pred_fallthru
      _
    // Predicated region
    $region50: #{tpu_custom_call.1} parent=1 // pred_check
      _
    $region51: #{tpu_custom_call.1} parent=1 // pred_check_branch
      %979 = sbr.rel (0) target = $region53
    $region52: #{tpu_custom_call.1} parent=1 // pred_region
      %980 = dma.done [#allocation6], 1024
    $region53: #{tpu_custom_call.1} parent=1 // pred_fallthru
      _
    %981 = vsyncpa [#allocation4], 1
    %982 = vsyncpa [#allocation6], 1

</llo_original>
